<compile_context>
chip_gen: v7x
topology: tpu7x:2x2x1
jax: 0.10.0
libtpu: 0.0.40
codegen_flags: <defaults>
</compile_context>

<pallas_src>
import functools

import jax
import jax.numpy as jnp
from jax.experimental import pallas as pl
from jax.experimental.pallas import tpu as pltpu


def _round_up(x, m):
    return ((x + m - 1) // m) * m


def _simclr_kernel(xq_ref, xk_ref, w0_ref, b0_ref, w1_ref, b1_ref,
                   w2_ref, b2_ref, loss_ref, accq_ref, acck_ref,
                   *, temperature, batch_size):
    """Gridded encoder matmul (K-tiled) + fused head / normalize / NT-Xent."""
    k = pl.program_id(0)

    # ---- init accumulators on the first K tile -------------------------------
    @pl.when(k == 0)
    def _init():
        accq_ref[...] = jnp.zeros_like(accq_ref)
        acck_ref[...] = jnp.zeros_like(acck_ref)

    # ---- K-tiled first matmul: bf16 inputs, f32 accumulation on the MXU ------
    w0 = w0_ref[...]
    accq_ref[...] += jnp.dot(xq_ref[...], w0, preferred_element_type=jnp.float32)
    acck_ref[...] += jnp.dot(xk_ref[...], w0, preferred_element_type=jnp.float32)

    # ---- epilogue on the last K tile: head + normalize + InstanceLoss --------
    @pl.when(k == pl.num_programs(0) - 1)
    def _finalize():
        b0 = b0_ref[...]
        w1 = w1_ref[...]
        b1 = b1_ref[...]
        w2 = w2_ref[...]
        b2 = b2_ref[...]

        def project(acc):
            h = acc + b0
            h = jnp.maximum(
                jnp.dot(h, w1, preferred_element_type=jnp.float32) + b1, 0.0)
            z = jnp.dot(h, w2, preferred_element_type=jnp.float32) + b2
            # F.normalize(dim=1): rsqrt-multiply; eps in squared domain (1e-12**2)
            inv = jax.lax.rsqrt(
                jnp.maximum(jnp.sum(z * z, axis=-1, keepdims=True), 1e-24))
            return z * inv

        zq = project(accq_ref[...])            # (B, fea_pad) f32, unit rows
        zk = project(acck_ref[...])

        inv_t = jnp.float32(1.0 / temperature)

        def sim_block(a, b):                   # (B, B) = (a @ b.T) / T
            return jax.lax.dot_general(
                a, b, (((1,), (1,)), ((), ())),
                preferred_element_type=jnp.float32) * inv_t

        sqq = sim_block(zq, zq)
        sqk = sim_block(zq, zk)
        skq = sim_block(zk, zq)
        skk = sim_block(zk, zk)

        neg_big = jnp.float32(-1e30)
        row = jax.lax.broadcasted_iota(jnp.int32, (batch_size, batch_size), 0)
        col = jax.lax.broadcasted_iota(jnp.int32, (batch_size, batch_size), 1)
        not_diag = row != col
        sqq_m = jnp.where(not_diag, sqq, neg_big)   # exclude self-similarity
        skk_m = jnp.where(not_diag, skk, neg_big)

        # positives: z_q[i] . z_k[i] / T  (same value for the paired k-row)
        pos = jnp.sum(zq * zk, axis=-1, keepdims=True) * inv_t      # (B, 1)

        def row_lse(a, b):
            m = jnp.maximum(jnp.max(a, axis=-1, keepdims=True),
                            jnp.max(b, axis=-1, keepdims=True))
            s = (jnp.sum(jnp.exp(a - m), axis=-1, keepdims=True)
                 + jnp.sum(jnp.exp(b - m), axis=-1, keepdims=True))
            return m + jnp.log(s)

        lse_q = row_lse(sqq_m, sqk)            # rows 0..B-1 of the 2B x 2B problem
        lse_k = row_lse(skk_m, skq)            # rows B..2B-1

        per_row = (lse_q - pos) + (lse_k - pos)                     # (B, 1)
        loss_ref[...] = (jnp.sum(per_row, axis=0, keepdims=True)
                         / (2 * batch_size))


def simclr_forward(im_q, im_k, params, temperature, *, tk=512):
    """Pallas-backed SimCLRWrapper.forward(im_q, im_k) -> scalar loss."""
    b = im_q.shape[0]
    xq = im_q.reshape(b, -1)
    xk = im_k.reshape(b, -1)
    d_flat = xq.shape[1]

    in_dim = params["w0"].shape[1]
    fea_dim = params["w2"].shape[1]
    in_pad = _round_up(in_dim, 128)            # lane-dense feature dims
    fea_pad = _round_up(fea_dim, 128)
    tk = min(tk, _round_up(d_flat, 128))
    d_pad = _round_up(d_flat, tk)
    n_k = d_pad // tk

    # Zero-pad (does not change the math) and cast the big operands to bf16.
    if d_pad != d_flat:
        xq = jnp.pad(xq, ((0, 0), (0, d_pad - d_flat)))
        xk = jnp.pad(xk, ((0, 0), (0, d_pad - d_flat)))
    xq = xq.astype(jnp.bfloat16)
    xk = xk.astype(jnp.bfloat16)

    w0 = jnp.pad(params["w0"], ((0, d_pad - d_flat), (0, in_pad - in_dim))
                 ).astype(jnp.bfloat16)
    b0 = jnp.pad(params["b0"], ((0, 0), (0, in_pad - in_dim))).astype(jnp.float32)
    w1 = jnp.pad(params["w1"], ((0, in_pad - in_dim), (0, in_pad - in_dim))
                 ).astype(jnp.float32)
    b1 = jnp.pad(params["b1"], ((0, 0), (0, in_pad - in_dim))).astype(jnp.float32)
    w2 = jnp.pad(params["w2"], ((0, in_pad - in_dim), (0, fea_pad - fea_dim))
                 ).astype(jnp.float32)
    b2 = jnp.pad(params["b2"], ((0, 0), (0, fea_pad - fea_dim))).astype(jnp.float32)

    kernel = functools.partial(_simclr_kernel,
                               temperature=float(temperature),
                               batch_size=int(b))

    grid_spec = pltpu.PrefetchScalarGridSpec(
        num_scalar_prefetch=0,
        grid=(n_k,),
        in_specs=[
            pl.BlockSpec((b, tk), lambda k: (0, k)),          # im_q rows, K tile
            pl.BlockSpec((b, tk), lambda k: (0, k)),          # im_k rows, K tile
            pl.BlockSpec((tk, in_pad), lambda k: (k, 0)),     # W0 K tile
            pl.BlockSpec((1, in_pad), lambda k: (0, 0)),      # b0 (resident)
            pl.BlockSpec((in_pad, in_pad), lambda k: (0, 0)), # W1 (resident)
            pl.BlockSpec((1, in_pad), lambda k: (0, 0)),      # b1
            pl.BlockSpec((in_pad, fea_pad), lambda k: (0, 0)),# W2
            pl.BlockSpec((1, fea_pad), lambda k: (0, 0)),     # b2
        ],
        out_specs=pl.BlockSpec((1, 1), lambda k: (0, 0)),
        scratch_shapes=[
            pltpu.VMEM((b, in_pad), jnp.float32),   # acc for q half
            pltpu.VMEM((b, in_pad), jnp.float32),   # acc for k half
        ],
    )

    loss = pl.pallas_call(
        kernel,
        grid_spec=grid_spec,
        out_shape=jax.ShapeDtypeStruct((1, 1), jnp.float32),
        compiler_params=pltpu.CompilerParams(
            dimension_semantics=("arbitrary",),     # K is a reduction axis
            vmem_limit_bytes=64 * 1024 * 1024,
        ),
    )(xq, xk, w0, b0, w1, b1, w2, b2)
    return loss[0, 0]


def reference_forward(im_q, im_k, params, temperature):
    """Pure-JAX reference (same bf16 quantization of x / W0 as the kernel)."""
    b = im_q.shape[0]
    xq = im_q.reshape(b, -1).astype(jnp.bfloat16).astype(jnp.float32)
    xk = im_k.reshape(b, -1).astype(jnp.bfloat16).astype(jnp.float32)
    w0 = params["w0"].astype(jnp.bfloat16).astype(jnp.float32)
    x = jnp.concatenate([xq, xk], axis=0)
    h = x @ w0 + params["b0"]
    h = jnp.maximum(h @ params["w1"] + params["b1"], 0.0)
    z = h @ params["w2"] + params["b2"]
    z = z / jnp.maximum(jnp.linalg.norm(z, axis=1, keepdims=True), 1e-12)
    n = 2 * b
    sim = (z @ z.T) / temperature
    eye = jnp.eye(n, dtype=bool)
    sim_no_self = jnp.where(eye, -1e30, sim)
    lse = jax.scipy.special.logsumexp(sim_no_self, axis=-1)
    pos_idx = (jnp.arange(n) + b) % n
    pos = sim[jnp.arange(n), pos_idx]
    return jnp.sum(lse - pos) / n


def init_params(key, d_flat, in_dim, fea_dim):
    k0, k1, k2 = jax.random.split(key, 3)
    scale = 0.02
    return {
        "w0": (scale * jax.random.normal(k0, (d_flat, in_dim))).astype(jnp.float32),
        "b0": jnp.zeros((1, in_dim), jnp.float32),
        "w1": (scale * jax.random.normal(k1, (in_dim, in_dim))).astype(jnp.float32),
        "b1": jnp.full((1, in_dim), 0.01, jnp.float32),
        "w2": (scale * jax.random.normal(k2, (in_dim, fea_dim))).astype(jnp.float32),
        "b2": jnp.zeros((1, fea_dim), jnp.float32),
    }


if __name__ == "__main__":
    B, C, H, W = 2, 4, 16, 16
    in_dim, fea_dim = 32, 16
    temperature = 0.5

    key = jax.random.PRNGKey(0)
    k_q, k_k, k_p = jax.random.split(key, 3)
    im_q = jax.random.normal(k_q, (B, C, H, W), jnp.float32)
    im_k = jax.random.normal(k_k, (B, C, H, W), jnp.float32)
    params = init_params(k_p, C * H * W, in_dim, fea_dim)

    loss = jax.block_until_ready(simclr_forward(im_q, im_k, params, temperature))
    ref = jax.block_until_ready(reference_forward(im_q, im_k, params, temperature))
    assert jnp.allclose(loss, ref, rtol=1e-3, atol=1e-3), (loss, ref)

    print("KERNEL_OK")
</pallas_src>

<mosaic_0001>
module attributes {stable_mosaic.version = 11 : i64} {
  func.func @_simclr_kernel(%arg0: i32, %arg1: memref<2x512xbf16, #tpu.memory_space<vmem>>, %arg2: memref<2x512xbf16, #tpu.memory_space<vmem>>, %arg3: memref<512x128xbf16, #tpu.memory_space<vmem>>, %arg4: memref<1x128xf32, #tpu.memory_space<vmem>>, %arg5: memref<128x128xf32, #tpu.memory_space<vmem>>, %arg6: memref<1x128xf32, #tpu.memory_space<vmem>>, %arg7: memref<128x128xf32, #tpu.memory_space<vmem>>, %arg8: memref<1x128xf32, #tpu.memory_space<vmem>>, %arg9: memref<1x1xf32, #tpu.memory_space<vmem>>, %arg10: memref<2x128xf32, #tpu.memory_space<vmem>>, %arg11: memref<2x128xf32, #tpu.memory_space<vmem>>) attributes {dimension_semantics = [#tpu.dimension_semantics<arbitrary>], iteration_bounds = array<i64: 2>, scalar_prefetch = 0 : i64, scratch_operands = 2 : i64, tpu.core_type = #tpu.core_type<tc>, window_params = [{transform_indices = @transform_0, window_bounds = array<i64: 2, 512>}, {transform_indices = @transform_1, window_bounds = array<i64: 2, 512>}, {transform_indices = @transform_2, window_bounds = array<i64: 512, 128>}, {pipeline_mode = #tpu.pipeline_mode<synchronous>, transform_indices = @transform_3, window_bounds = array<i64: 1, 128>}, {pipeline_mode = #tpu.pipeline_mode<synchronous>, transform_indices = @transform_4, window_bounds = array<i64: 128, 128>}, {pipeline_mode = #tpu.pipeline_mode<synchronous>, transform_indices = @transform_5, window_bounds = array<i64: 1, 128>}, {pipeline_mode = #tpu.pipeline_mode<synchronous>, transform_indices = @transform_6, window_bounds = array<i64: 128, 128>}, {pipeline_mode = #tpu.pipeline_mode<synchronous>, transform_indices = @transform_7, window_bounds = array<i64: 1, 128>}, {pipeline_mode = #tpu.pipeline_mode<synchronous>, transform_indices = @transform_8, window_bounds = array<i64: 1, 1>}]} {
    %c0_i32 = arith.constant 0 : i32
    %0 = arith.cmpi eq, %arg0, %c0_i32 : i32
    %1 = arith.extui %0 : i1 to i32
    %c0_i32_0 = arith.constant 0 : i32
    %2 = arith.cmpi ne, %1, %c0_i32_0 : i32
    scf.if %2 {
      %cst_16 = arith.constant 0.000000e+00 : f32
      %17 = vector.broadcast %cst_16 : f32 to vector<2x128xf32>
      %c0_17 = arith.constant 0 : index
      %c0_18 = arith.constant 0 : index
      %18 = vector.load %arg10[%c0_17, %c0_18] : memref<2x128xf32, #tpu.memory_space<vmem>>, vector<2x128xf32>
      tpu.vector_store %arg10[%c0_17, %c0_18], %17 {strides = array<i32>} : memref<2x128xf32, #tpu.memory_space<vmem>>, vector<2x128xf32>,
      %cst_19 = arith.constant 0.000000e+00 : f32
      %19 = vector.broadcast %cst_19 : f32 to vector<2x128xf32>
      %c0_20 = arith.constant 0 : index
      %c0_21 = arith.constant 0 : index
      %20 = vector.load %arg11[%c0_20, %c0_21] : memref<2x128xf32, #tpu.memory_space<vmem>>, vector<2x128xf32>
      tpu.vector_store %arg11[%c0_20, %c0_21], %19 {strides = array<i32>} : memref<2x128xf32, #tpu.memory_space<vmem>>, vector<2x128xf32>,
    } else {
    }
    %c0 = arith.constant 0 : index
    %c0_1 = arith.constant 0 : index
    %3 = vector.load %arg3[%c0, %c0_1] : memref<512x128xbf16, #tpu.memory_space<vmem>>, vector<512x128xbf16>
    %c0_2 = arith.constant 0 : index
    %c0_3 = arith.constant 0 : index
    %4 = vector.load %arg10[%c0_2, %c0_3] : memref<2x128xf32, #tpu.memory_space<vmem>>, vector<2x128xf32>
    %c0_4 = arith.constant 0 : index
    %c0_5 = arith.constant 0 : index
    %5 = vector.load %arg1[%c0_4, %c0_5] : memref<2x512xbf16, #tpu.memory_space<vmem>>, vector<2x512xbf16>
    %cst = arith.constant dense<0.000000e+00> : vector<2x128xf32>
    %6 = tpu.matmul %5, %3, %cst {dimension_numbers = #tpu.dot_dimension_numbers<[1], [0], [0], [1], [0, 0, 1, 1], [], []>} : vector<2x512xbf16>, vector<512x128xbf16>, vector<2x128xf32> -> vector<2x128xf32>
    %7 = arith.addf %4, %6 : vector<2x128xf32>
    %c0_6 = arith.constant 0 : index
    %c0_7 = arith.constant 0 : index
    %8 = vector.load %arg10[%c0_6, %c0_7] : memref<2x128xf32, #tpu.memory_space<vmem>>, vector<2x128xf32>
    tpu.vector_store %arg10[%c0_6, %c0_7], %7 {strides = array<i32>} : memref<2x128xf32, #tpu.memory_space<vmem>>, vector<2x128xf32>,
    %c0_8 = arith.constant 0 : index
    %c0_9 = arith.constant 0 : index
    %9 = vector.load %arg11[%c0_8, %c0_9] : memref<2x128xf32, #tpu.memory_space<vmem>>, vector<2x128xf32>
    %c0_10 = arith.constant 0 : index
    %c0_11 = arith.constant 0 : index
    %10 = vector.load %arg2[%c0_10, %c0_11] : memref<2x512xbf16, #tpu.memory_space<vmem>>, vector<2x512xbf16>
    %cst_12 = arith.constant dense<0.000000e+00> : vector<2x128xf32>
    %11 = tpu.matmul %10, %3, %cst_12 {dimension_numbers = #tpu.dot_dimension_numbers<[1], [0], [0], [1], [0, 0, 1, 1], [], []>} : vector<2x512xbf16>, vector<512x128xbf16>, vector<2x128xf32> -> vector<2x128xf32>
    %12 = arith.addf %9, %11 : vector<2x128xf32>
    %c0_13 = arith.constant 0 : index
    %c0_14 = arith.constant 0 : index
    %13 = vector.load %arg11[%c0_13, %c0_14] : memref<2x128xf32, #tpu.memory_space<vmem>>, vector<2x128xf32>
    tpu.vector_store %arg11[%c0_13, %c0_14], %12 {strides = array<i32>} : memref<2x128xf32, #tpu.memory_space<vmem>>, vector<2x128xf32>,
    %c1_i32 = arith.constant 1 : i32
    %14 = arith.cmpi eq, %arg0, %c1_i32 : i32
    %15 = arith.extui %14 : i1 to i32
    %c0_i32_15 = arith.constant 0 : i32
    %16 = arith.cmpi ne, %15, %c0_i32_15 : i32
    scf.if %16 {
      %c0_16 = arith.constant 0 : index
      %c0_17 = arith.constant 0 : index
      %17 = vector.load %arg4[%c0_16, %c0_17] : memref<1x128xf32, #tpu.memory_space<vmem>>, vector<1x128xf32>
      %c0_18 = arith.constant 0 : index
      %c0_19 = arith.constant 0 : index
      %18 = vector.load %arg5[%c0_18, %c0_19] : memref<128x128xf32, #tpu.memory_space<vmem>>, vector<128x128xf32>
      %c0_20 = arith.constant 0 : index
      %c0_21 = arith.constant 0 : index
      %19 = vector.load %arg6[%c0_20, %c0_21] : memref<1x128xf32, #tpu.memory_space<vmem>>, vector<1x128xf32>
      %c0_22 = arith.constant 0 : index
      %c0_23 = arith.constant 0 : index
      %20 = vector.load %arg7[%c0_22, %c0_23] : memref<128x128xf32, #tpu.memory_space<vmem>>, vector<128x128xf32>
      %c0_24 = arith.constant 0 : index
      %c0_25 = arith.constant 0 : index
      %21 = vector.load %arg8[%c0_24, %c0_25] : memref<1x128xf32, #tpu.memory_space<vmem>>, vector<1x128xf32>
      %c0_26 = arith.constant 0 : index
      %c0_27 = arith.constant 0 : index
      %22 = vector.load %arg10[%c0_26, %c0_27] : memref<2x128xf32, #tpu.memory_space<vmem>>, vector<2x128xf32>
      %23 = vector.broadcast %17 : vector<1x128xf32> to vector<2x128xf32>
      %24 = arith.addf %22, %23 : vector<2x128xf32>
      %cst_28 = arith.constant dense<0.000000e+00> : vector<2x128xf32>
      %25 = tpu.matmul %24, %18, %cst_28 {dimension_numbers = #tpu.dot_dimension_numbers<[1], [0], [0], [1], [0, 0, 1, 1], [], []>} : vector<2x128xf32>, vector<128x128xf32>, vector<2x128xf32> -> vector<2x128xf32>
      %26 = vector.broadcast %19 : vector<1x128xf32> to vector<2x128xf32>
      %27 = arith.addf %25, %26 : vector<2x128xf32>
      %cst_29 = arith.constant 0.000000e+00 : f32
      %28 = vector.broadcast %cst_29 : f32 to vector<2x128xf32>
      %29 = arith.maximumf %27, %28 : vector<2x128xf32>
      %cst_30 = arith.constant dense<0.000000e+00> : vector<2x128xf32>
      %30 = tpu.matmul %29, %20, %cst_30 {dimension_numbers = #tpu.dot_dimension_numbers<[1], [0], [0], [1], [0, 0, 1, 1], [], []>} : vector<2x128xf32>, vector<128x128xf32>, vector<2x128xf32> -> vector<2x128xf32>
      %31 = vector.broadcast %21 : vector<1x128xf32> to vector<2x128xf32>
      %32 = arith.addf %30, %31 : vector<2x128xf32>
      %33 = arith.mulf %32, %32 : vector<2x128xf32>
      %cst_31 = arith.constant dense<0.000000e+00> : vector<2xf32>
      %34 = vector.multi_reduction <add>, %33, %cst_31 [1] : vector<2x128xf32> to vector<2xf32>
      %35 = vector.shape_cast %34 : vector<2xf32> to vector<2x1xf32>
      %cst_32 = arith.constant 1.000000e-24 : f32
      %36 = vector.broadcast %cst_32 : f32 to vector<2x1xf32>
      %37 = arith.maximumf %35, %36 : vector<2x1xf32>
      %38 = math.rsqrt %37 : vector<2x1xf32>
      %39 = vector.broadcast %38 : vector<2x1xf32> to vector<2x128xf32>
      %40 = arith.mulf %32, %39 : vector<2x128xf32>
      %c0_33 = arith.constant 0 : index
      %c0_34 = arith.constant 0 : index
      %41 = vector.load %arg11[%c0_33, %c0_34] : memref<2x128xf32, #tpu.memory_space<vmem>>, vector<2x128xf32>
      %42 = vector.broadcast %17 : vector<1x128xf32> to vector<2x128xf32>
      %43 = arith.addf %41, %42 : vector<2x128xf32>
      %cst_35 = arith.constant dense<0.000000e+00> : vector<2x128xf32>
      %44 = tpu.matmul %43, %18, %cst_35 {dimension_numbers = #tpu.dot_dimension_numbers<[1], [0], [0], [1], [0, 0, 1, 1], [], []>} : vector<2x128xf32>, vector<128x128xf32>, vector<2x128xf32> -> vector<2x128xf32>
      %45 = vector.broadcast %19 : vector<1x128xf32> to vector<2x128xf32>
      %46 = arith.addf %44, %45 : vector<2x128xf32>
      %cst_36 = arith.constant 0.000000e+00 : f32
      %47 = vector.broadcast %cst_36 : f32 to vector<2x128xf32>
      %48 = arith.maximumf %46, %47 : vector<2x128xf32>
      %cst_37 = arith.constant dense<0.000000e+00> : vector<2x128xf32>
      %49 = tpu.matmul %48, %20, %cst_37 {dimension_numbers = #tpu.dot_dimension_numbers<[1], [0], [0], [1], [0, 0, 1, 1], [], []>} : vector<2x128xf32>, vector<128x128xf32>, vector<2x128xf32> -> vector<2x128xf32>
      %50 = vector.broadcast %21 : vector<1x128xf32> to vector<2x128xf32>
      %51 = arith.addf %49, %50 : vector<2x128xf32>
      %52 = arith.mulf %51, %51 : vector<2x128xf32>
      %cst_38 = arith.constant dense<0.000000e+00> : vector<2xf32>
      %53 = vector.multi_reduction <add>, %52, %cst_38 [1] : vector<2x128xf32> to vector<2xf32>
      %54 = vector.shape_cast %53 : vector<2xf32> to vector<2x1xf32>
      %cst_39 = arith.constant 1.000000e-24 : f32
      %55 = vector.broadcast %cst_39 : f32 to vector<2x1xf32>
      %56 = arith.maximumf %54, %55 : vector<2x1xf32>
      %57 = math.rsqrt %56 : vector<2x1xf32>
      %58 = vector.broadcast %57 : vector<2x1xf32> to vector<2x128xf32>
      %59 = arith.mulf %51, %58 : vector<2x128xf32>
      %cst_40 = arith.constant dense<0.000000e+00> : vector<2x2xf32>
      %60 = tpu.matmul %40, %40, %cst_40 {dimension_numbers = #tpu.dot_dimension_numbers<[1], [1], [0], [0], [0, 0, 1, 0], [], []>} : vector<2x128xf32>, vector<2x128xf32>, vector<2x2xf32> -> vector<2x2xf32>
      %cst_41 = arith.constant 2.000000e+00 : f32
      %61 = vector.broadcast %cst_41 : f32 to vector<2x2xf32>
      %62 = arith.mulf %60, %61 : vector<2x2xf32>
      %cst_42 = arith.constant dense<0.000000e+00> : vector<2x2xf32>
      %63 = tpu.matmul %40, %59, %cst_42 {dimension_numbers = #tpu.dot_dimension_numbers<[1], [1], [0], [0], [0, 0, 1, 0], [], []>} : vector<2x128xf32>, vector<2x128xf32>, vector<2x2xf32> -> vector<2x2xf32>
      %cst_43 = arith.constant 2.000000e+00 : f32
      %64 = vector.broadcast %cst_43 : f32 to vector<2x2xf32>
      %65 = arith.mulf %63, %64 : vector<2x2xf32>
      %cst_44 = arith.constant dense<0.000000e+00> : vector<2x2xf32>
      %66 = tpu.matmul %59, %40, %cst_44 {dimension_numbers = #tpu.dot_dimension_numbers<[1], [1], [0], [0], [0, 0, 1, 0], [], []>} : vector<2x128xf32>, vector<2x128xf32>, vector<2x2xf32> -> vector<2x2xf32>
      %cst_45 = arith.constant 2.000000e+00 : f32
      %67 = vector.broadcast %cst_45 : f32 to vector<2x2xf32>
      %68 = arith.mulf %66, %67 : vector<2x2xf32>
      %cst_46 = arith.constant dense<0.000000e+00> : vector<2x2xf32>
      %69 = tpu.matmul %59, %59, %cst_46 {dimension_numbers = #tpu.dot_dimension_numbers<[1], [1], [0], [0], [0, 0, 1, 0], [], []>} : vector<2x128xf32>, vector<2x128xf32>, vector<2x2xf32> -> vector<2x2xf32>
      %cst_47 = arith.constant 2.000000e+00 : f32
      %70 = vector.broadcast %cst_47 : f32 to vector<2x2xf32>
      %71 = arith.mulf %69, %70 : vector<2x2xf32>
      %72 = tpu.iota {dimensions = array<i32: 0>} : vector<2x2xi32>
      %73 = tpu.iota {dimensions = array<i32: 1>} : vector<2x2xi32>
      %74 = arith.cmpi ne, %72, %73 : vector<2x2xi32>
      %cst_48 = arith.constant -1.000000e+30 : f32
      %75 = vector.broadcast %cst_48 : f32 to vector<2x2xf32>
      %76 = arith.select %74, %62, %75 : vector<2x2xi1>, vector<2x2xf32>
      %cst_49 = arith.constant -1.000000e+30 : f32
      %77 = vector.broadcast %cst_49 : f32 to vector<2x2xf32>
      %78 = arith.select %74, %71, %77 : vector<2x2xi1>, vector<2x2xf32>
      %79 = arith.mulf %40, %59 : vector<2x128xf32>
      %cst_50 = arith.constant dense<0.000000e+00> : vector<2xf32>
      %80 = vector.multi_reduction <add>, %79, %cst_50 [1] : vector<2x128xf32> to vector<2xf32>
      %81 = vector.shape_cast %80 : vector<2xf32> to vector<2x1xf32>
      %cst_51 = arith.constant 2.000000e+00 : f32
      %82 = vector.broadcast %cst_51 : f32 to vector<2x1xf32>
      %83 = arith.mulf %81, %82 : vector<2x1xf32>
      %cst_52 = arith.constant dense<0xFF800000> : vector<2xf32>
      %84 = vector.multi_reduction <maximumf>, %76, %cst_52 [1] : vector<2x2xf32> to vector<2xf32>
      %85 = vector.shape_cast %84 : vector<2xf32> to vector<2x1xf32>
      %cst_53 = arith.constant dense<0xFF800000> : vector<2xf32>
      %86 = vector.multi_reduction <maximumf>, %65, %cst_53 [1] : vector<2x2xf32> to vector<2xf32>
      %87 = vector.shape_cast %86 : vector<2xf32> to vector<2x1xf32>
      %88 = arith.maximumf %85, %87 : vector<2x1xf32>
      %89 = vector.broadcast %88 : vector<2x1xf32> to vector<2x2xf32>
      %90 = arith.subf %76, %89 : vector<2x2xf32>
      %91 = math.exp %90 : vector<2x2xf32>
      %cst_54 = arith.constant dense<0.000000e+00> : vector<2xf32>
      %92 = vector.multi_reduction <add>, %91, %cst_54 [1] : vector<2x2xf32> to vector<2xf32>
      %93 = vector.shape_cast %92 : vector<2xf32> to vector<2x1xf32>
      %94 = vector.broadcast %88 : vector<2x1xf32> to vector<2x2xf32>
      %95 = arith.subf %65, %94 : vector<2x2xf32>
      %96 = math.exp %95 : vector<2x2xf32>
      %cst_55 = arith.constant dense<0.000000e+00> : vector<2xf32>
      %97 = vector.multi_reduction <add>, %96, %cst_55 [1] : vector<2x2xf32> to vector<2xf32>
      %98 = vector.shape_cast %97 : vector<2xf32> to vector<2x1xf32>
      %99 = arith.addf %93, %98 : vector<2x1xf32>
      %100 = math.log %99 : vector<2x1xf32>
      %101 = arith.addf %88, %100 : vector<2x1xf32>
      %cst_56 = arith.constant dense<0xFF800000> : vector<2xf32>
      %102 = vector.multi_reduction <maximumf>, %78, %cst_56 [1] : vector<2x2xf32> to vector<2xf32>
      %103 = vector.shape_cast %102 : vector<2xf32> to vector<2x1xf32>
      %cst_57 = arith.constant dense<0xFF800000> : vector<2xf32>
      %104 = vector.multi_reduction <maximumf>, %68, %cst_57 [1] : vector<2x2xf32> to vector<2xf32>
      %105 = vector.shape_cast %104 : vector<2xf32> to vector<2x1xf32>
      %106 = arith.maximumf %103, %105 : vector<2x1xf32>
      %107 = vector.broadcast %106 : vector<2x1xf32> to vector<2x2xf32>
      %108 = arith.subf %78, %107 : vector<2x2xf32>
      %109 = math.exp %108 : vector<2x2xf32>
      %cst_58 = arith.constant dense<0.000000e+00> : vector<2xf32>
      %110 = vector.multi_reduction <add>, %109, %cst_58 [1] : vector<2x2xf32> to vector<2xf32>
      %111 = vector.shape_cast %110 : vector<2xf32> to vector<2x1xf32>
      %112 = vector.broadcast %106 : vector<2x1xf32> to vector<2x2xf32>
      %113 = arith.subf %68, %112 : vector<2x2xf32>
      %114 = math.exp %113 : vector<2x2xf32>
      %cst_59 = arith.constant dense<0.000000e+00> : vector<2xf32>
      %115 = vector.multi_reduction <add>, %114, %cst_59 [1] : vector<2x2xf32> to vector<2xf32>
      %116 = vector.shape_cast %115 : vector<2xf32> to vector<2x1xf32>
      %117 = arith.addf %111, %116 : vector<2x1xf32>
      %118 = math.log %117 : vector<2x1xf32>
      %119 = arith.addf %106, %118 : vector<2x1xf32>
      %120 = arith.subf %101, %83 : vector<2x1xf32>
      %121 = arith.subf %119, %83 : vector<2x1xf32>
      %122 = arith.addf %120, %121 : vector<2x1xf32>
      %cst_60 = arith.constant dense<0.000000e+00> : vector<1xf32>
      %123 = vector.multi_reduction <add>, %122, %cst_60 [0] : vector<2x1xf32> to vector<1xf32>
      %124 = vector.shape_cast %123 : vector<1xf32> to vector<1x1xf32>
      %cst_61 = arith.constant 4.000000e+00 : f32
      %125 = vector.broadcast %cst_61 : f32 to vector<1x1xf32>
      %126 = arith.divf %124, %125 : vector<1x1xf32>
      %c0_62 = arith.constant 0 : index
      %c0_63 = arith.constant 0 : index
      %127 = vector.load %arg9[%c0_62, %c0_63] : memref<1x1xf32, #tpu.memory_space<vmem>>, vector<1x1xf32>
      tpu.vector_store %arg9[%c0_62, %c0_63], %126 {strides = array<i32>} : memref<1x1xf32, #tpu.memory_space<vmem>>, vector<1x1xf32>,
    } else {
    }
    return
  }
  func.func @transform_0(%arg0: i32) -> (i32, i32) {
    %c0_i32 = arith.constant 0 : i32
    %c0_i32_0 = arith.constant 0 : i32
    return %c0_i32, %arg0 : i32, i32
  }
  func.func @transform_1(%arg0: i32) -> (i32, i32) {
    %c0_i32 = arith.constant 0 : i32
    %c0_i32_0 = arith.constant 0 : i32
    return %c0_i32, %arg0 : i32, i32
  }
  func.func @transform_2(%arg0: i32) -> (i32, i32) {
    %c0_i32 = arith.constant 0 : i32
    %c0_i32_0 = arith.constant 0 : i32
    return %arg0, %c0_i32 : i32, i32
  }
  func.func @transform_3(%arg0: i32) -> (i32, i32) {
    %c0_i32 = arith.constant 0 : i32
    %c0_i32_0 = arith.constant 0 : i32
    %c0_i32_1 = arith.constant 0 : i32
    return %c0_i32, %c0_i32_0 : i32, i32
  }
  func.func @transform_4(%arg0: i32) -> (i32, i32) {
    %c0_i32 = arith.constant 0 : i32
    %c0_i32_0 = arith.constant 0 : i32
    %c0_i32_1 = arith.constant 0 : i32
    return %c0_i32, %c0_i32_0 : i32, i32
  }
  func.func @transform_5(%arg0: i32) -> (i32, i32) {
    %c0_i32 = arith.constant 0 : i32
    %c0_i32_0 = arith.constant 0 : i32
    %c0_i32_1 = arith.constant 0 : i32
    return %c0_i32, %c0_i32_0 : i32, i32
  }
  func.func @transform_6(%arg0: i32) -> (i32, i32) {
    %c0_i32 = arith.constant 0 : i32
    %c0_i32_0 = arith.constant 0 : i32
    %c0_i32_1 = arith.constant 0 : i32
    return %c0_i32, %c0_i32_0 : i32, i32
  }
  func.func @transform_7(%arg0: i32) -> (i32, i32) {
    %c0_i32 = arith.constant 0 : i32
    %c0_i32_0 = arith.constant 0 : i32
    %c0_i32_1 = arith.constant 0 : i32
    return %c0_i32, %c0_i32_0 : i32, i32
  }
  func.func @transform_8(%arg0: i32) -> (i32, i32) {
    %c0_i32 = arith.constant 0 : i32
    %c0_i32_0 = arith.constant 0 : i32
    %c0_i32_1 = arith.constant 0 : i32
    return %c0_i32, %c0_i32_0 : i32, i32
  }
}

</mosaic_0001>

<llo_original>
// kernel: tpu_custom_call.1
$region0: #{tpu_custom_call.1}
  #allocation0 [shape = 'u32[]', space=smem, size = 0x4, offset = 0x4, fixed_abs, tag = 'smem constant byte address 0x4 - core index']
  #allocation1 [shape = 'u32[144,128]{1,0:T(1,128)}', space=vmem, size = 0x12000, scoped, tag = 'internal scratch']
  #allocation2 [shape = 'f32[2,128]{1,0:T(2,128)}', space=vmem, size = 0x400, scoped, tag = 'scratch operand']
  #allocation3 [shape = 'f32[2,128]{1,0:T(2,128)}', space=vmem, size = 0x400, scoped, tag = 'scratch operand']
  %s0 = inlined_call_operand.hbm [shape: bf16[2,1024], index: 0, kind: input, shape index: {}]
  %s1 = inlined_call_operand.hbm [shape: bf16[2,1024], index: 1, kind: input, shape index: {}]
  %s2 = inlined_call_operand.hbm [shape: bf16[1024,128], index: 2, kind: input, shape index: {}]
  %s3 = inlined_call_operand.hbm [shape: f32[1,128], index: 3, kind: input, shape index: {}]
  %s4 = inlined_call_operand.hbm [shape: f32[128,128], index: 4, kind: input, shape index: {}]
  %s5 = inlined_call_operand.hbm [shape: f32[1,128], index: 5, kind: input, shape index: {}]
  %s6 = inlined_call_operand.hbm [shape: f32[128,128], index: 6, kind: input, shape index: {}]
  %s7 = inlined_call_operand.hbm [shape: f32[1,128], index: 7, kind: input, shape index: {}]
  %s8 = inlined_call_operand.hbm [shape: f32[1,1], index: 8, kind: output, shape index: {}]
  %s9 = sld [smem:[#allocation0]]
  $region105: #{tpu_custom_call.1} parent=0
    _
  %s11 = ssub.s32 1, %s9
  %s12 = scalar_select 0, %s11, %s9
  $region1: #{tpu_custom_call.1} parent=0
    #allocation4 [shape = 'u8[4096]{0}', space=vmem, size = 0x1000, scoped, tag = 'input window, operand 0']
    #allocation5 [shape = 's32[2]{0}', space=sflag, size = 0x8, scoped, tag = 'scoped memory for tpu_custom_call.1']
    #allocation6 [shape = 's32[2]{0}', space=sflag, size = 0x8, scoped, tag = 'scoped memory for tpu_custom_call.1']
    #allocation7 [shape = 'u8[4096]{0}', space=vmem, size = 0x1000, scoped, tag = 'input window, operand 1']
    #allocation8 [shape = 's32[2]{0}', space=sflag, size = 0x8, scoped, tag = 'scoped memory for tpu_custom_call.1']
    #allocation9 [shape = 'u8[262144]{0}', space=vmem, size = 0x40000, scoped, tag = 'input window, operand 2']
    #allocation10 [shape = 'u8[512]{0}', space=vmem, size = 0x400, scoped, tag = 'input window, operand 3, single buffered']
    #allocation11 [shape = 's32[1]{0}', space=sflag, size = 0x4, scoped, tag = 'scoped memory for tpu_custom_call.1']
    #allocation12 [shape = 'u8[65536]{0}', space=vmem, size = 0x10000, scoped, tag = 'input window, operand 4, single buffered']
    #allocation13 [shape = 'u8[512]{0}', space=vmem, size = 0x400, scoped, tag = 'input window, operand 5, single buffered']
    #allocation14 [shape = 's32[1]{0}', space=sflag, size = 0x4, scoped, tag = 'scoped memory for tpu_custom_call.1']
    #allocation15 [shape = 'u8[65536]{0}', space=vmem, size = 0x10000, scoped, tag = 'input window, operand 6, single buffered']
    #allocation16 [shape = 'u8[512]{0}', space=vmem, size = 0x400, scoped, tag = 'input window, operand 7, single buffered']
    #allocation17 [shape = 's32[1]{0}', space=sflag, size = 0x4, scoped, tag = 'scoped memory for tpu_custom_call.1']
    #allocation18 [shape = 'u8[512]{0}', space=vmem, size = 0x400, scoped, tag = 'output window, operand 0, single buffered']
    %13 = vsyncpa [#allocation5], 0
    %s14 = scalar_lea.sflag [#allocation5], 1
    %15 = vsyncpa %s14, 0
    %16 = vsyncpa [#allocation8], 0
    %s17 = scalar_lea.sflag [#allocation8], 1
    %18 = vsyncpa %s17, 0
    %19 = vsyncpa [#allocation11], 0
    %20 = vsyncpa [#allocation14], 0
    %21 = vsyncpa [#allocation17], 0
    %22 = vsyncpa [#allocation6], 0
    loop: start=0, step=1, limit=4
    $region2: #{tpu_custom_call.1} parent=1 // loop_pre_header
      _
    $region3: #{tpu_custom_call.1} parent=1 // loop_header
      %s24 = sphi 0, %s28
      %p25 = scmp.ge.s32.totalorder %s24, 4
      %s34 = sphi 0, %s36
      %s37 = sphi 0, %s34
      %s38 = sphi 0, %s37
      %s54 = sphi 0, %s38
      %s60 = sphi 0, %s62
      %s63 = sphi 0, %s60
      %s64 = sphi 0, %s63
      %s80 = sphi 0, %s64
      %s86 = sphi 0, %s88
      %s89 = sphi 0, %s86
      %s90 = sphi 0, %s89
      %s106 = sphi 0, %s90
      %s110 = sphi 0, %s110
      %s112 = sphi 0, %s110
      %s113 = sphi 0, %s112
      %s127 = sphi 0, %s113
      %s131 = sphi 0, %s131
      %s133 = sphi 0, %s131
      %s134 = sphi 0, %s133
      %s148 = sphi 0, %s134
      %s152 = sphi 0, %s152
      %s154 = sphi 0, %s152
      %s155 = sphi 0, %s154
      %s169 = sphi 0, %s155
      %s173 = sphi 0, %s173
      %s175 = sphi 0, %s173
      %s176 = sphi 0, %s175
      %s190 = sphi 0, %s176
      %s194 = sphi 0, %s194
      %s196 = sphi 0, %s194
      %s197 = sphi 0, %s196
      %s211 = sphi 0, %s197
      %s215 = sphi 0, %s215
      %s217 = sphi 0, %s215
      %s218 = sphi 0, %s217
      %s232 = sphi 0, %s218
    $region4: #{tpu_custom_call.1} parent=1 // loop_header_branch
      %27 = sbr.rel (%p25) target = $region8
    $region5: #{tpu_custom_call.1} parent=1 // loop_body
      %s29 = ssub.s32 %s24, 1
      %s30 = ssub.s32 %s24, 2
      %s31 = sadd.s32 %s24, 1
      %s32 = ssub.s32 %s24, %s31
      %p33 = scmp.eq.s32.totalorder %s32, 0
      %s35 = sadd.s32 %s34, 1
      %s36 = scalar_select %p33, %s34, %s35
      %p39 = pneg %p33
      %p40 = scmp.eq.s32.totalorder %s24, 1
      %p41 = por %p39, %p40
      %p42 = scmp.ne.s32.totalorder %s34, %s37
      %p43 = scmp.eq.s32.totalorder %s24, 0
      %p44 = por %p42, %p43
      %p45 = scmp.ne.s32.totalorder %s34, %s37
      %p46 = scmp.eq.s32.totalorder %s29, 1
      %p47 = por %p45, %p46
      %p48 = scmp.ne.s32.totalorder %s37, %s38
      %p49 = scmp.eq.s32.totalorder %s29, 0
      %p50 = por %p48, %p49
      %p51 = scmp.ne.s32.totalorder %s37, %s38
      %p52 = scmp.eq.s32.totalorder %s30, 1
      %p53 = por %p51, %p52
      %p55 = scmp.ne.s32.totalorder %s38, %s54
      %p56 = scmp.eq.s32.totalorder %s30, 0
      %p57 = por %p55, %p56
      %s58 = ssub.s32 %s24, %s31
      %p59 = scmp.eq.s32.totalorder %s58, 0
      %s61 = sadd.s32 %s60, 1
      %s62 = scalar_select %p59, %s60, %s61
      %p65 = pneg %p59
      %p66 = scmp.eq.s32.totalorder %s24, 1
      %p67 = por %p65, %p66
      %p68 = scmp.ne.s32.totalorder %s60, %s63
      %p69 = scmp.eq.s32.totalorder %s24, 0
      %p70 = por %p68, %p69
      %p71 = scmp.ne.s32.totalorder %s60, %s63
      %p72 = scmp.eq.s32.totalorder %s29, 1
      %p73 = por %p71, %p72
      %p74 = scmp.ne.s32.totalorder %s63, %s64
      %p75 = scmp.eq.s32.totalorder %s29, 0
      %p76 = por %p74, %p75
      %p77 = scmp.ne.s32.totalorder %s63, %s64
      %p78 = scmp.eq.s32.totalorder %s30, 1
      %p79 = por %p77, %p78
      %p81 = scmp.ne.s32.totalorder %s64, %s80
      %p82 = scmp.eq.s32.totalorder %s30, 0
      %p83 = por %p81, %p82
      %s84 = ssub.s32 %s24, %s31
      %p85 = scmp.eq.s32.totalorder %s84, 0
      %s87 = sadd.s32 %s86, 1
      %s88 = scalar_select %p85, %s86, %s87
      %p91 = pneg %p85
      %p92 = scmp.eq.s32.totalorder %s24, 1
      %p93 = por %p91, %p92
      %p94 = scmp.ne.s32.totalorder %s86, %s89
      %p95 = scmp.eq.s32.totalorder %s24, 0
      %p96 = por %p94, %p95
      %p97 = scmp.ne.s32.totalorder %s86, %s89
      %p98 = scmp.eq.s32.totalorder %s29, 1
      %p99 = por %p97, %p98
      %p100 = scmp.ne.s32.totalorder %s89, %s90
      %p101 = scmp.eq.s32.totalorder %s29, 0
      %p102 = por %p100, %p101
      %p103 = scmp.ne.s32.totalorder %s89, %s90
      %p104 = scmp.eq.s32.totalorder %s30, 1
      %p105 = por %p103, %p104
      %p107 = scmp.ne.s32.totalorder %s90, %s106
      %p108 = scmp.eq.s32.totalorder %s30, 0
      %p109 = por %p107, %p108
      %s111 = sadd.s32 %s110, 1
      %p114 = scmp.eq.s32.totalorder %s24, 1
      %p115 = scmp.ne.s32.totalorder %s110, %s112
      %p116 = scmp.eq.s32.totalorder %s24, 0
      %p117 = por %p115, %p116
      %p118 = scmp.ne.s32.totalorder %s110, %s112
      %p119 = scmp.eq.s32.totalorder %s29, 1
      %p120 = por %p118, %p119
      %p121 = scmp.ne.s32.totalorder %s112, %s113
      %p122 = scmp.eq.s32.totalorder %s29, 0
      %p123 = por %p121, %p122
      %p124 = scmp.ne.s32.totalorder %s112, %s113
      %p125 = scmp.eq.s32.totalorder %s30, 1
      %p126 = por %p124, %p125
      %p128 = scmp.ne.s32.totalorder %s113, %s127
      %p129 = scmp.eq.s32.totalorder %s30, 0
      %p130 = por %p128, %p129
      %s132 = sadd.s32 %s131, 1
      %p135 = scmp.eq.s32.totalorder %s24, 1
      %p136 = scmp.ne.s32.totalorder %s131, %s133
      %p137 = scmp.eq.s32.totalorder %s24, 0
      %p138 = por %p136, %p137
      %p139 = scmp.ne.s32.totalorder %s131, %s133
      %p140 = scmp.eq.s32.totalorder %s29, 1
      %p141 = por %p139, %p140
      %p142 = scmp.ne.s32.totalorder %s133, %s134
      %p143 = scmp.eq.s32.totalorder %s29, 0
      %p144 = por %p142, %p143
      %p145 = scmp.ne.s32.totalorder %s133, %s134
      %p146 = scmp.eq.s32.totalorder %s30, 1
      %p147 = por %p145, %p146
      %p149 = scmp.ne.s32.totalorder %s134, %s148
      %p150 = scmp.eq.s32.totalorder %s30, 0
      %p151 = por %p149, %p150
      %s153 = sadd.s32 %s152, 1
      %p156 = scmp.eq.s32.totalorder %s24, 1
      %p157 = scmp.ne.s32.totalorder %s152, %s154
      %p158 = scmp.eq.s32.totalorder %s24, 0
      %p159 = por %p157, %p158
      %p160 = scmp.ne.s32.totalorder %s152, %s154
      %p161 = scmp.eq.s32.totalorder %s29, 1
      %p162 = por %p160, %p161
      %p163 = scmp.ne.s32.totalorder %s154, %s155
      %p164 = scmp.eq.s32.totalorder %s29, 0
      %p165 = por %p163, %p164
      %p166 = scmp.ne.s32.totalorder %s154, %s155
      %p167 = scmp.eq.s32.totalorder %s30, 1
      %p168 = por %p166, %p167
      %p170 = scmp.ne.s32.totalorder %s155, %s169
      %p171 = scmp.eq.s32.totalorder %s30, 0
      %p172 = por %p170, %p171
      %s174 = sadd.s32 %s173, 1
      %p177 = scmp.eq.s32.totalorder %s24, 1
      %p178 = scmp.ne.s32.totalorder %s173, %s175
      %p179 = scmp.eq.s32.totalorder %s24, 0
      %p180 = por %p178, %p179
      %p181 = scmp.ne.s32.totalorder %s173, %s175
      %p182 = scmp.eq.s32.totalorder %s29, 1
      %p183 = por %p181, %p182
      %p184 = scmp.ne.s32.totalorder %s175, %s176
      %p185 = scmp.eq.s32.totalorder %s29, 0
      %p186 = por %p184, %p185
      %p187 = scmp.ne.s32.totalorder %s175, %s176
      %p188 = scmp.eq.s32.totalorder %s30, 1
      %p189 = por %p187, %p188
      %p191 = scmp.ne.s32.totalorder %s176, %s190
      %p192 = scmp.eq.s32.totalorder %s30, 0
      %p193 = por %p191, %p192
      %s195 = sadd.s32 %s194, 1
      %p198 = scmp.eq.s32.totalorder %s24, 1
      %p199 = scmp.ne.s32.totalorder %s194, %s196
      %p200 = scmp.eq.s32.totalorder %s24, 0
      %p201 = por %p199, %p200
      %p202 = scmp.ne.s32.totalorder %s194, %s196
      %p203 = scmp.eq.s32.totalorder %s29, 1
      %p204 = por %p202, %p203
      %p205 = scmp.ne.s32.totalorder %s196, %s197
      %p206 = scmp.eq.s32.totalorder %s29, 0
      %p207 = por %p205, %p206
      %p208 = scmp.ne.s32.totalorder %s196, %s197
      %p209 = scmp.eq.s32.totalorder %s30, 1
      %p210 = por %p208, %p209
      %p212 = scmp.ne.s32.totalorder %s197, %s211
      %p213 = scmp.eq.s32.totalorder %s30, 0
      %p214 = por %p212, %p213
      %s216 = sadd.s32 %s215, 1
      %p219 = scmp.eq.s32.totalorder %s24, 1
      %p220 = scmp.ne.s32.totalorder %s215, %s217
      %p221 = scmp.eq.s32.totalorder %s24, 0
      %p222 = por %p220, %p221
      %p223 = scmp.ne.s32.totalorder %s215, %s217
      %p224 = scmp.eq.s32.totalorder %s29, 1
      %p225 = por %p223, %p224
      %p226 = scmp.ne.s32.totalorder %s217, %s218
      %p227 = scmp.eq.s32.totalorder %s29, 0
      %p228 = por %p226, %p227
      %p229 = scmp.ne.s32.totalorder %s217, %s218
      %p230 = scmp.eq.s32.totalorder %s30, 1
      %p231 = por %p229, %p230
      %p233 = scmp.ne.s32.totalorder %s218, %s232
      %p234 = scmp.eq.s32.totalorder %s30, 0
      %p235 = por %p233, %p234
      %p236 = scmp.le.s32.totalorder 1, %s24
      %p237 = scmp.lt.s32.totalorder %s24, 3
      %p238 = pnand %p236, %p237
      %p239 = pneg %p238
      // Predicated region
      $region9: #{tpu_custom_call.1} parent=5 // pred_check
        _
      $region10: #{tpu_custom_call.1} parent=5 // pred_check_branch
        %241 = sbr.rel (%p238) target = $region12
      $region11: #{tpu_custom_call.1} parent=5 // pred_region
        %s242 = ssub.s32 %s24, 1
        // Predicated region
        $region13: #{tpu_custom_call.1} parent=11 // pred_check
          %p243 = pneg %p123
        $region14: #{tpu_custom_call.1} parent=11 // pred_check_branch
          %245 = sbr.rel (%p243) target = $region16
        $region15: #{tpu_custom_call.1} parent=11 // pred_region
          %s247 = ssub.s32 16, 16
          %248 = vsyncadd [#allocation11], %s247
          %s250 = sshll.u32 [#allocation10], 4
          %s251 = int_to_ptr.vmem [resolvable:$true] %s250
          %253 = dma.hbm_to_vmem [thread:$0]  %s3, 16, %s251, [#allocation11]
        $region16: #{tpu_custom_call.1} parent=11 // pred_fallthru
          _
        // Predicated region
        $region17: #{tpu_custom_call.1} parent=11 // pred_check
          %p254 = pneg %p144
        $region18: #{tpu_custom_call.1} parent=11 // pred_check_branch
          %256 = sbr.rel (%p254) target = $region20
        $region19: #{tpu_custom_call.1} parent=11 // pred_region
          %s258 = ssub.s32 2048, 2048
          %259 = vsyncadd [#allocation11], %s258
          %s260 = sshll.u32 [#allocation12], 4
          %s261 = int_to_ptr.vmem [resolvable:$true] %s260
          %266 = dma.hbm_to_vmem [thread:$0]  %s4, 2048, %s261, [#allocation11], 128, 128, 8
        $region20: #{tpu_custom_call.1} parent=11 // pred_fallthru
          _
        // Predicated region
        $region21: #{tpu_custom_call.1} parent=11 // pred_check
          %p267 = pneg %p165
        $region22: #{tpu_custom_call.1} parent=11 // pred_check_branch
          %269 = sbr.rel (%p267) target = $region24
        $region23: #{tpu_custom_call.1} parent=11 // pred_region
          %s271 = ssub.s32 16, 16
          %272 = vsyncadd [#allocation14], %s271
          %s274 = sshll.u32 [#allocation13], 4
          %s275 = int_to_ptr.vmem [resolvable:$true] %s274
          %277 = dma.hbm_to_vmem [thread:$0]  %s5, 16, %s275, [#allocation14]
        $region24: #{tpu_custom_call.1} parent=11 // pred_fallthru
          _
        // Predicated region
        $region25: #{tpu_custom_call.1} parent=11 // pred_check
          %p278 = pneg %p186
        $region26: #{tpu_custom_call.1} parent=11 // pred_check_branch
          %280 = sbr.rel (%p278) target = $region28
        $region27: #{tpu_custom_call.1} parent=11 // pred_region
          %s282 = ssub.s32 2048, 2048
          %283 = vsyncadd [#allocation14], %s282
          %s284 = sshll.u32 [#allocation15], 4
          %s285 = int_to_ptr.vmem [resolvable:$true] %s284
          %290 = dma.hbm_to_vmem [thread:$0]  %s6, 2048, %s285, [#allocation14], 128, 128, 8
        $region28: #{tpu_custom_call.1} parent=11 // pred_fallthru
          _
        // Predicated region
        $region29: #{tpu_custom_call.1} parent=11 // pred_check
          %p291 = pneg %p207
        $region30: #{tpu_custom_call.1} parent=11 // pred_check_branch
          %293 = sbr.rel (%p291) target = $region32
        $region31: #{tpu_custom_call.1} parent=11 // pred_region
          %s295 = ssub.s32 16, 16
          %296 = vsyncadd [#allocation17], %s295
          %s298 = sshll.u32 [#allocation16], 4
          %s299 = int_to_ptr.vmem [resolvable:$true] %s298
          %301 = dma.hbm_to_vmem [thread:$0]  %s7, 16, %s299, [#allocation17]
        $region32: #{tpu_custom_call.1} parent=11 // pred_fallthru
          _
      $region12: #{tpu_custom_call.1} parent=5 // pred_fallthru
        _
      %p302 = scmp.lt.s32.totalorder %s24, 2
      // Predicated region
      $region33: #{tpu_custom_call.1} parent=5 // pred_check
        %p303 = pneg %p302
      $region34: #{tpu_custom_call.1} parent=5 // pred_check_branch
        %305 = sbr.rel (%p303) target = $region36
      $region35: #{tpu_custom_call.1} parent=5 // pred_region
        // Predicated region
        $region37: #{tpu_custom_call.1} parent=35 // pred_check
          %p306 = pneg %p44
        $region38: #{tpu_custom_call.1} parent=35 // pred_check_branch
          %308 = sbr.rel (%p306) target = $region40
        $region39: #{tpu_custom_call.1} parent=35 // pred_region
          %s309 = sand.u32 %s34, 1
          %s310 = scalar_lea.sflag [#allocation5], %s309
          %s311 = sand.u32 %s34, 1
          %s312 = smul.addr %s311, 4
          %s313 = scalar_lea.vmem [#allocation4], %s312
          %s314 = smul.u32 4, %s24
          %s316 = ssub.s32 64, 64
          %317 = vsyncadd %s310, %s316
          %s318 = smul.addr %s314, 16
          %s319 = scalar_lea.hbm %s0, %s318
          %s321 = sshll.u32 %s313, 4
          %s322 = int_to_ptr.vmem [resolvable:$true] %s321
          %324 = dma.hbm_to_vmem [thread:$0]  %s319, 64, %s322, %s310
        $region40: #{tpu_custom_call.1} parent=35 // pred_fallthru
          _
        // Predicated region
        $region41: #{tpu_custom_call.1} parent=35 // pred_check
          %p325 = pneg %p70
        $region42: #{tpu_custom_call.1} parent=35 // pred_check_branch
          %327 = sbr.rel (%p325) target = $region44
        $region43: #{tpu_custom_call.1} parent=35 // pred_region
          %s328 = sand.u32 %s24, 1
          %s329 = scalar_lea.sflag [#allocation8], %s328
          %s330 = sand.u32 %s60, 1
          %s331 = smul.addr %s330, 4
          %s332 = scalar_lea.vmem [#allocation7], %s331
          %s333 = smul.u32 4, %s24
          %s335 = ssub.s32 64, 64
          %336 = vsyncadd %s329, %s335
          %s337 = smul.addr %s333, 16
          %s338 = scalar_lea.hbm %s1, %s337
          %s340 = sshll.u32 %s332, 4
          %s341 = int_to_ptr.vmem [resolvable:$true] %s340
          %343 = dma.hbm_to_vmem [thread:$0]  %s338, 64, %s341, %s329
        $region44: #{tpu_custom_call.1} parent=35 // pred_fallthru
          _
        // Predicated region
        $region45: #{tpu_custom_call.1} parent=35 // pred_check
          %p344 = pneg %p96
        $region46: #{tpu_custom_call.1} parent=35 // pred_check_branch
          %346 = sbr.rel (%p344) target = $region48
        $region47: #{tpu_custom_call.1} parent=35 // pred_region
          %s347 = sand.u32 %s24, 1
          %s348 = scalar_lea.sflag [#allocation8], %s347
          %s349 = sand.u32 %s86, 1
          %s350 = smul.addr %s349, 256
          %s351 = scalar_lea.vmem [#allocation9], %s350
          %s352 = smul.u32 64, %s24
          %s354 = ssub.s32 4096, 4096
          %355 = vsyncadd %s348, %s354
          %s356 = smul.addr %s352, 64
          %s357 = scalar_lea.hbm %s2, %s356
          %s358 = sshll.u32 %s351, 4
          %s359 = int_to_ptr.vmem [resolvable:$true] %s358
          %364 = dma.hbm_to_vmem [thread:$0]  %s357, 4096, %s359, %s348, 64, 64, 4
        $region48: #{tpu_custom_call.1} parent=35 // pred_fallthru
          _
      $region36: #{tpu_custom_call.1} parent=5 // pred_fallthru
        _
      %p365 = scmp.le.s32.totalorder 1, %s24
      %p366 = scmp.lt.s32.totalorder %s24, 3
      %p367 = pnand %p365, %p366
      %p368 = pneg %p367
      // Predicated region
      $region49: #{tpu_custom_call.1} parent=5 // pred_check
        _
      $region50: #{tpu_custom_call.1} parent=5 // pred_check_branch
        %370 = sbr.rel (%p367) target = $region52
      $region51: #{tpu_custom_call.1} parent=5 // pred_region
        %s371 = ssub.s32 %s24, 1
        %s372 = sand.u32 %s37, 1
        %s373 = scalar_lea.sflag [#allocation5], %s372
        %s374 = sand.u32 %s37, 1
        %s375 = smul.addr %s374, 4
        %s376 = scalar_lea.vmem [#allocation4], %s375
        // Predicated region
        $region53: #{tpu_custom_call.1} parent=51 // pred_check
          %p377 = pneg %p50
        $region54: #{tpu_custom_call.1} parent=51 // pred_check_branch
          %379 = sbr.rel (%p377) target = $region56
        $region55: #{tpu_custom_call.1} parent=51 // pred_region
          %380 = dma.done %s373, 64
        $region56: #{tpu_custom_call.1} parent=51 // pred_fallthru
          _
        %s381 = sand.u32 %s29, 1
        %s382 = scalar_lea.sflag [#allocation8], %s381
        %s383 = sand.u32 %s63, 1
        %s384 = smul.addr %s383, 4
        %s385 = scalar_lea.vmem [#allocation7], %s384
        // Predicated region
        $region57: #{tpu_custom_call.1} parent=51 // pred_check
          %p386 = pneg %p76
        $region58: #{tpu_custom_call.1} parent=51 // pred_check_branch
          %388 = sbr.rel (%p386) target = $region60
        $region59: #{tpu_custom_call.1} parent=51 // pred_region
          %389 = dma.done %s382, 64
        $region60: #{tpu_custom_call.1} parent=51 // pred_fallthru
          _
        %s390 = sand.u32 %s29, 1
        %s391 = scalar_lea.sflag [#allocation8], %s390
        %s392 = sand.u32 %s89, 1
        %s393 = smul.addr %s392, 256
        %s394 = scalar_lea.vmem [#allocation9], %s393
        // Predicated region
        $region61: #{tpu_custom_call.1} parent=51 // pred_check
          %p395 = pneg %p102
        $region62: #{tpu_custom_call.1} parent=51 // pred_check_branch
          %397 = sbr.rel (%p395) target = $region64
        $region63: #{tpu_custom_call.1} parent=51 // pred_region
          %398 = dma.done %s391, 4096
        $region64: #{tpu_custom_call.1} parent=51 // pred_fallthru
          _
        // Predicated region
        $region65: #{tpu_custom_call.1} parent=51 // pred_check
          %p399 = pneg %p123
        $region66: #{tpu_custom_call.1} parent=51 // pred_check_branch
          %401 = sbr.rel (%p399) target = $region68
        $region67: #{tpu_custom_call.1} parent=51 // pred_region
          %402 = dma.done [#allocation11], 16
        $region68: #{tpu_custom_call.1} parent=51 // pred_fallthru
          _
        // Predicated region
        $region69: #{tpu_custom_call.1} parent=51 // pred_check
          %p403 = pneg %p144
        $region70: #{tpu_custom_call.1} parent=51 // pred_check_branch
          %405 = sbr.rel (%p403) target = $region72
        $region71: #{tpu_custom_call.1} parent=51 // pred_region
          %406 = dma.done [#allocation11], 2048
        $region72: #{tpu_custom_call.1} parent=51 // pred_fallthru
          _
        // Predicated region
        $region73: #{tpu_custom_call.1} parent=51 // pred_check
          %p407 = pneg %p165
        $region74: #{tpu_custom_call.1} parent=51 // pred_check_branch
          %409 = sbr.rel (%p407) target = $region76
        $region75: #{tpu_custom_call.1} parent=51 // pred_region
          %410 = dma.done [#allocation14], 16
        $region76: #{tpu_custom_call.1} parent=51 // pred_fallthru
          _
        // Predicated region
        $region77: #{tpu_custom_call.1} parent=51 // pred_check
          %p411 = pneg %p186
        $region78: #{tpu_custom_call.1} parent=51 // pred_check_branch
          %413 = sbr.rel (%p411) target = $region80
        $region79: #{tpu_custom_call.1} parent=51 // pred_region
          %414 = dma.done [#allocation14], 2048
        $region80: #{tpu_custom_call.1} parent=51 // pred_fallthru
          _
        // Predicated region
        $region81: #{tpu_custom_call.1} parent=51 // pred_check
          %p415 = pneg %p207
        $region82: #{tpu_custom_call.1} parent=51 // pred_check_branch
          %417 = sbr.rel (%p415) target = $region84
        $region83: #{tpu_custom_call.1} parent=51 // pred_region
          %418 = dma.done [#allocation17], 16
        $region84: #{tpu_custom_call.1} parent=51 // pred_fallthru
          _
        %s419 = sand.u32 %s37, 1
        %s420 = scalar_lea.sflag [#allocation5], %s419
        %s421 = sand.u32 %s37, 1
        %s422 = smul.addr %s421, 4
        %s423 = scalar_lea.vmem [#allocation4], %s422
        %p424 = pneg %p50
        %p425 = pneg %p47
        %s426 = sand.u32 %s29, 1
        %s427 = scalar_lea.sflag [#allocation8], %s426
        %s428 = sand.u32 %s63, 1
        %s429 = smul.addr %s428, 4
        %s430 = scalar_lea.vmem [#allocation7], %s429
        %p431 = pneg %p76
        %p432 = pneg %p73
        %s433 = sand.u32 %s29, 1
        %s434 = scalar_lea.sflag [#allocation8], %s433
        %s435 = sand.u32 %s89, 1
        %s436 = smul.addr %s435, 256
        %s437 = scalar_lea.vmem [#allocation9], %s436
        %p438 = pneg %p102
        %p439 = pneg %p99
        %p440 = pneg %p123
        %p441 = pneg %p120
        %p442 = pneg %p144
        %p443 = pneg %p141
        %p444 = pneg %p165
        %p445 = pneg %p162
        %p446 = pneg %p186
        %p447 = pneg %p183
        %p448 = pneg %p207
        %p449 = pneg %p204
        %p450 = pneg %p228
        %p451 = pneg %p225
        %s452 = smul.u32 4, %s29
        %s453 = smul.u32 4, %s29
        %s454 = smul.u32 64, %s29
        %p456 = scmp.eq.s32.totalorder %s29, 0
        // Predicated region
        $region85: #{tpu_custom_call.1} parent=51 // pred_check
          %p457 = pneg %p456
        $region86: #{tpu_custom_call.1} parent=51 // pred_check_branch
          %459 = sbr.rel (%p457) target = $region88
        $region87: #{tpu_custom_call.1} parent=51 // pred_region
          %460 = vst [vmem:[#allocation2] sm:$0x3] 0.0
          %461 = vst [vmem:[#allocation3] sm:$0x3] 0.0
        $region88: #{tpu_custom_call.1} parent=51 // pred_fallthru
          _
        %v462 = vld [vmem:[%s394] sm:$0xf]
        %v463 = vld [vmem:[%s394 + $0x4] sm:$0xf]
        %v464 = vld [vmem:[%s394 + $0x8] sm:$0xf]
        %v465 = vld [vmem:[%s394 + $0xc] sm:$0xf]
        %v466 = vld [vmem:[%s394 + $0x10] sm:$0xf]
        %v467 = vld [vmem:[%s394 + $0x14] sm:$0xf]
        %v468 = vld [vmem:[%s394 + $0x18] sm:$0xf]
        %v469 = vld [vmem:[%s394 + $0x1c] sm:$0xf]
        %v470 = vld [vmem:[%s394 + $0x20] sm:$0xf]
        %v471 = vld [vmem:[%s394 + $0x24] sm:$0xf]
        %v472 = vld [vmem:[%s394 + $0x28] sm:$0xf]
        %v473 = vld [vmem:[%s394 + $0x2c] sm:$0xf]
        %v474 = vld [vmem:[%s394 + $0x30] sm:$0xf]
        %v475 = vld [vmem:[%s394 + $0x34] sm:$0xf]
        %v476 = vld [vmem:[%s394 + $0x38] sm:$0xf]
        %v477 = vld [vmem:[%s394 + $0x3c] sm:$0xf]
        %v478 = vld [vmem:[%s394 + $0x40] sm:$0xf]
        %v479 = vld [vmem:[%s394 + $0x44] sm:$0xf]
        %v480 = vld [vmem:[%s394 + $0x48] sm:$0xf]
        %v481 = vld [vmem:[%s394 + $0x4c] sm:$0xf]
        %v482 = vld [vmem:[%s394 + $0x50] sm:$0xf]
        %v483 = vld [vmem:[%s394 + $0x54] sm:$0xf]
        %v484 = vld [vmem:[%s394 + $0x58] sm:$0xf]
        %v485 = vld [vmem:[%s394 + $0x5c] sm:$0xf]
        %v486 = vld [vmem:[%s394 + $0x60] sm:$0xf]
        %v487 = vld [vmem:[%s394 + $0x64] sm:$0xf]
        %v488 = vld [vmem:[%s394 + $0x68] sm:$0xf]
        %v489 = vld [vmem:[%s394 + $0x6c] sm:$0xf]
        %v490 = vld [vmem:[%s394 + $0x70] sm:$0xf]
        %v491 = vld [vmem:[%s394 + $0x74] sm:$0xf]
        %v492 = vld [vmem:[%s394 + $0x78] sm:$0xf]
        %v493 = vld [vmem:[%s394 + $0x7c] sm:$0xf]
        %v494 = vld [vmem:[%s394 + $0x80] sm:$0xf]
        %v495 = vld [vmem:[%s394 + $0x84] sm:$0xf]
        %v496 = vld [vmem:[%s394 + $0x88] sm:$0xf]
        %v497 = vld [vmem:[%s394 + $0x8c] sm:$0xf]
        %v498 = vld [vmem:[%s394 + $0x90] sm:$0xf]
        %v499 = vld [vmem:[%s394 + $0x94] sm:$0xf]
        %v500 = vld [vmem:[%s394 + $0x98] sm:$0xf]
        %v501 = vld [vmem:[%s394 + $0x9c] sm:$0xf]
        %v502 = vld [vmem:[%s394 + $0xa0] sm:$0xf]
        %v503 = vld [vmem:[%s394 + $0xa4] sm:$0xf]
        %v504 = vld [vmem:[%s394 + $0xa8] sm:$0xf]
        %v505 = vld [vmem:[%s394 + $0xac] sm:$0xf]
        %v506 = vld [vmem:[%s394 + $0xb0] sm:$0xf]
        %v507 = vld [vmem:[%s394 + $0xb4] sm:$0xf]
        %v508 = vld [vmem:[%s394 + $0xb8] sm:$0xf]
        %v509 = vld [vmem:[%s394 + $0xbc] sm:$0xf]
        %v510 = vld [vmem:[%s394 + $0xc0] sm:$0xf]
        %v511 = vld [vmem:[%s394 + $0xc4] sm:$0xf]
        %v512 = vld [vmem:[%s394 + $0xc8] sm:$0xf]
        %v513 = vld [vmem:[%s394 + $0xcc] sm:$0xf]
        %v514 = vld [vmem:[%s394 + $0xd0] sm:$0xf]
        %v515 = vld [vmem:[%s394 + $0xd4] sm:$0xf]
        %v516 = vld [vmem:[%s394 + $0xd8] sm:$0xf]
        %v517 = vld [vmem:[%s394 + $0xdc] sm:$0xf]
        %v518 = vld [vmem:[%s394 + $0xe0] sm:$0xf]
        %v519 = vld [vmem:[%s394 + $0xe4] sm:$0xf]
        %v520 = vld [vmem:[%s394 + $0xe8] sm:$0xf]
        %v521 = vld [vmem:[%s394 + $0xec] sm:$0xf]
        %v522 = vld [vmem:[%s394 + $0xf0] sm:$0xf]
        %v523 = vld [vmem:[%s394 + $0xf4] sm:$0xf]
        %v524 = vld [vmem:[%s394 + $0xf8] sm:$0xf]
        %v525 = vld [vmem:[%s394 + $0xfc] sm:$0xf]
        %v526 = vld [vmem:[#allocation2] sm:$0x3]
        %v527 = vld [vmem:[%s376] sm:$0xf]
        %v530 = vunpack.c.l.s4 1966171168
        %v531 = vunpack.c.0.s8 %v530
        %v532 = vlaneseq
        %v533 = vshrl.u32 %v532, 7
        %v534 = vsub.s32 %v531, %v533
        %v535 = vrot.slane %v527, %v534
        %v536 = vcombine.high %v535, %v535
        %v538 = vunpack.c.l.s4 1966171168
        %v539 = vunpack.c.0.s8 %v538
        %v540 = vlaneseq
        %v541 = vshrl.u32 %v540, 7
        %v542 = vsub.s32 %v539, %v541
        %v543 = vrot.slane %v535, %v542
        %v545 = vunpack.c.l.s4 1966171168
        %v546 = vunpack.c.0.s8 %v545
        %v547 = vlaneseq
        %v548 = vshrl.u32 %v547, 7
        %v549 = vsub.s32 %v546, %v548
        %v550 = vrot.slane %v536, %v549
        %v551 = vcombine.high %v543, %v543
        %v552 = vcombine.high %v550, %v550
        %v621 = vunpack.c.l.b16 %v462
        %v622 = vunpack.c.l.b16 %v463
        %v623 = vunpack.c.l.b16 %v464
        %v624 = vunpack.c.l.b16 %v465
        %v625 = vunpack.c.l.b16 %v466
        %v626 = vunpack.c.l.b16 %v467
        %v627 = vunpack.c.l.b16 %v468
        %v628 = vunpack.c.l.b16 %v469
        %v629 = vunpack.c.l.b16 %v470
        %v630 = vunpack.c.l.b16 %v471
        %v631 = vunpack.c.l.b16 %v472
        %v632 = vunpack.c.l.b16 %v473
        %v633 = vunpack.c.l.b16 %v474
        %v634 = vunpack.c.l.b16 %v475
        %v635 = vunpack.c.l.b16 %v476
        %v636 = vunpack.c.l.b16 %v477
        %v637 = vunpack.c.l.b16 %v478
        %v638 = vunpack.c.l.b16 %v479
        %v639 = vunpack.c.l.b16 %v480
        %v640 = vunpack.c.l.b16 %v481
        %v641 = vunpack.c.l.b16 %v482
        %v642 = vunpack.c.l.b16 %v483
        %v643 = vunpack.c.l.b16 %v484
        %v644 = vunpack.c.l.b16 %v485
        %v645 = vunpack.c.l.b16 %v486
        %v646 = vunpack.c.l.b16 %v487
        %v647 = vunpack.c.l.b16 %v488
        %v648 = vunpack.c.l.b16 %v489
        %v649 = vunpack.c.l.b16 %v490
        %v650 = vunpack.c.l.b16 %v491
        %v651 = vunpack.c.l.b16 %v492
        %v652 = vunpack.c.l.b16 %v493
        %v653 = vunpack.c.l.b16 %v494
        %v654 = vunpack.c.l.b16 %v495
        %v655 = vunpack.c.l.b16 %v496
        %v656 = vunpack.c.l.b16 %v497
        %v657 = vunpack.c.l.b16 %v498
        %v658 = vunpack.c.l.b16 %v499
        %v659 = vunpack.c.l.b16 %v500
        %v660 = vunpack.c.l.b16 %v501
        %v661 = vunpack.c.l.b16 %v502
        %v662 = vunpack.c.l.b16 %v503
        %v663 = vunpack.c.l.b16 %v504
        %v664 = vunpack.c.l.b16 %v505
        %v665 = vunpack.c.l.b16 %v506
        %v666 = vunpack.c.l.b16 %v507
        %v667 = vunpack.c.l.b16 %v508
        %v668 = vunpack.c.l.b16 %v509
        %v669 = vunpack.c.l.b16 %v510
        %v670 = vunpack.c.l.b16 %v511
        %v671 = vunpack.c.l.b16 %v512
        %v672 = vunpack.c.l.b16 %v513
        %v673 = vunpack.c.l.b16 %v514
        %v674 = vunpack.c.l.b16 %v515
        %v675 = vunpack.c.l.b16 %v516
        %v676 = vunpack.c.l.b16 %v517
        %v677 = vunpack.c.l.b16 %v518
        %v678 = vunpack.c.l.b16 %v519
        %v679 = vunpack.c.l.b16 %v520
        %v680 = vunpack.c.l.b16 %v521
        %v681 = vunpack.c.l.b16 %v522
        %v682 = vunpack.c.l.b16 %v523
        %v683 = vunpack.c.l.b16 %v524
        %v684 = vunpack.c.l.b16 %v525
        %v685 = vpack.c.b16 %v622, %v621
        %v686 = vpack.c.b16 %v624, %v623
        %v687 = vpack.c.b16 %v626, %v625
        %v688 = vpack.c.b16 %v628, %v627
        %v689 = vpack.c.b16 %v630, %v629
        %v690 = vpack.c.b16 %v632, %v631
        %v691 = vpack.c.b16 %v634, %v633
        %v692 = vpack.c.b16 %v636, %v635
        %v693 = vpack.c.b16 %v638, %v637
        %v694 = vpack.c.b16 %v640, %v639
        %v695 = vpack.c.b16 %v642, %v641
        %v696 = vpack.c.b16 %v644, %v643
        %v697 = vpack.c.b16 %v646, %v645
        %v698 = vpack.c.b16 %v648, %v647
        %v699 = vpack.c.b16 %v650, %v649
        %v700 = vpack.c.b16 %v652, %v651
        %v701 = vpack.c.b16 %v654, %v653
        %v702 = vpack.c.b16 %v656, %v655
        %v703 = vpack.c.b16 %v658, %v657
        %v704 = vpack.c.b16 %v660, %v659
        %v705 = vpack.c.b16 %v662, %v661
        %v706 = vpack.c.b16 %v664, %v663
        %v707 = vpack.c.b16 %v666, %v665
        %v708 = vpack.c.b16 %v668, %v667
        %v709 = vpack.c.b16 %v670, %v669
        %v710 = vpack.c.b16 %v672, %v671
        %v711 = vpack.c.b16 %v674, %v673
        %v712 = vpack.c.b16 %v676, %v675
        %v713 = vpack.c.b16 %v678, %v677
        %v714 = vpack.c.b16 %v680, %v679
        %v715 = vpack.c.b16 %v682, %v681
        %v716 = vpack.c.b16 %v684, %v683
        %749 = vmatprep.subr.bf16.mxu0 0
        %750 = vmatpush1.bf16.msra.mxu0 %v685
        %751 = vmatprep.subr.bf16.mxu0 0
        %752 = vmatpush1.bf16.msra.mxu0 %v686
        %753 = vmatprep.subr.bf16.mxu0 0
        %754 = vmatpush1.bf16.msra.mxu0 %v687
        %755 = vmatprep.subr.bf16.mxu0 0
        %756 = vmatpush1.bf16.msra.mxu0 %v688
        %757 = vmatprep.subr.bf16.mxu0 0
        %758 = vmatpush1.bf16.msra.mxu0 %v689
        %759 = vmatprep.subr.bf16.mxu0 0
        %760 = vmatpush1.bf16.msra.mxu0 %v690
        %761 = vmatprep.subr.bf16.mxu0 0
        %762 = vmatpush1.bf16.msra.mxu0 %v691
        %763 = vmatprep.subr.bf16.mxu0 0
        %764 = vmatpush1.bf16.msra.mxu0 %v692
        %765 = vmatprep.subr.bf16.mxu0 0
        %766 = vmatpush1.bf16.msra.mxu0 %v693
        %767 = vmatprep.subr.bf16.mxu0 0
        %768 = vmatpush1.bf16.msra.mxu0 %v694
        %769 = vmatprep.subr.bf16.mxu0 0
        %770 = vmatpush1.bf16.msra.mxu0 %v695
        %771 = vmatprep.subr.bf16.mxu0 0
        %772 = vmatpush1.bf16.msra.mxu0 %v696
        %773 = vmatprep.subr.bf16.mxu0 0
        %774 = vmatpush1.bf16.msra.mxu0 %v697
        %775 = vmatprep.subr.bf16.mxu0 0
        %776 = vmatpush1.bf16.msra.mxu0 %v698
        %777 = vmatprep.subr.bf16.mxu0 0
        %778 = vmatpush1.bf16.msra.mxu0 %v699
        %779 = vmatprep.subr.bf16.mxu0 0
        %780 = vmatpush1.bf16.msra.mxu0 %v700
        %781 = vmatprep.mubr.bf16.mxu0 %v550
        %782 = vmatmul.mubr.bf16.gmra.mrb[0].mxu0 %v543
        %v783 = vpop.f32.mrb[0].mxu0
        %v784 = vadd.f32 0.0, %v783
        %v785 = vpop.f32.mrb[0].mxu0
        %v786 = vpop.f32.mrb[0].mxu0
        %v787 = vpop.f32.mrb[0].mxu0
        %788 = vdwg.mxu0
        %789 = vmatprep.subr.bf16.mxu0 0
        %790 = vmatpush1.bf16.msra.mxu0 %v701
        %791 = vmatprep.subr.bf16.mxu0 0
        %792 = vmatpush1.bf16.msra.mxu0 %v702
        %793 = vmatprep.subr.bf16.mxu0 0
        %794 = vmatpush1.bf16.msra.mxu0 %v703
        %795 = vmatprep.subr.bf16.mxu0 0
        %796 = vmatpush1.bf16.msra.mxu0 %v704
        %797 = vmatprep.subr.bf16.mxu0 0
        %798 = vmatpush1.bf16.msra.mxu0 %v705
        %799 = vmatprep.subr.bf16.mxu0 0
        %800 = vmatpush1.bf16.msra.mxu0 %v706
        %801 = vmatprep.subr.bf16.mxu0 0
        %802 = vmatpush1.bf16.msra.mxu0 %v707
        %803 = vmatprep.subr.bf16.mxu0 0
        %804 = vmatpush1.bf16.msra.mxu0 %v708
        %805 = vmatprep.subr.bf16.mxu0 0
        %806 = vmatpush1.bf16.msra.mxu0 %v709
        %807 = vmatprep.subr.bf16.mxu0 0
        %808 = vmatpush1.bf16.msra.mxu0 %v710
        %809 = vmatprep.subr.bf16.mxu0 0
        %810 = vmatpush1.bf16.msra.mxu0 %v711
        %811 = vmatprep.subr.bf16.mxu0 0
        %812 = vmatpush1.bf16.msra.mxu0 %v712
        %813 = vmatprep.subr.bf16.mxu0 0
        %814 = vmatpush1.bf16.msra.mxu0 %v713
        %815 = vmatprep.subr.bf16.mxu0 0
        %816 = vmatpush1.bf16.msra.mxu0 %v714
        %817 = vmatprep.subr.bf16.mxu0 0
        %818 = vmatpush1.bf16.msra.mxu0 %v715
        %819 = vmatprep.subr.bf16.mxu0 0
        %820 = vmatpush1.bf16.msra.mxu0 %v716
        %821 = vmatprep.mubr.bf16.mxu0 %v552
        %822 = vmatmul.mubr.bf16.gmra.mrb[0].mxu0 %v551
        %v823 = vpop.f32.mrb[0].mxu0
        %v824 = vadd.f32 %v784, %v823
        %v825 = vpop.f32.mrb[0].mxu0
        %v826 = vpop.f32.mrb[0].mxu0
        %v827 = vpop.f32.mrb[0].mxu0
        %828 = vdwg.mxu0
        %v829 = vadd.f32 %v526, %v824
        %830 = vst [vmem:[#allocation2] sm:$0x3] %v829
        %v831 = vld [vmem:[#allocation3] sm:$0x3]
        %v832 = vld [vmem:[%s385] sm:$0xf]
        %v835 = vunpack.c.l.s4 1966171168
        %v836 = vunpack.c.0.s8 %v835
        %v837 = vlaneseq
        %v838 = vshrl.u32 %v837, 7
        %v839 = vsub.s32 %v836, %v838
        %v840 = vrot.slane %v832, %v839
        %v841 = vcombine.high %v840, %v840
        %v843 = vunpack.c.l.s4 1966171168
        %v844 = vunpack.c.0.s8 %v843
        %v845 = vlaneseq
        %v846 = vshrl.u32 %v845, 7
        %v847 = vsub.s32 %v844, %v846
        %v848 = vrot.slane %v840, %v847
        %v850 = vunpack.c.l.s4 1966171168
        %v851 = vunpack.c.0.s8 %v850
        %v852 = vlaneseq
        %v853 = vshrl.u32 %v852, 7
        %v854 = vsub.s32 %v851, %v853
        %v855 = vrot.slane %v841, %v854
        %v856 = vcombine.high %v848, %v848
        %v857 = vcombine.high %v855, %v855
        %862 = vmatprep.subr.bf16.mxu0 0
        %863 = vmatpush1.bf16.msra.mxu0 %v685
        %864 = vmatprep.subr.bf16.mxu0 0
        %865 = vmatpush1.bf16.msra.mxu0 %v686
        %866 = vmatprep.subr.bf16.mxu0 0
        %867 = vmatpush1.bf16.msra.mxu0 %v687
        %868 = vmatprep.subr.bf16.mxu0 0
        %869 = vmatpush1.bf16.msra.mxu0 %v688
        %870 = vmatprep.subr.bf16.mxu0 0
        %871 = vmatpush1.bf16.msra.mxu0 %v689
        %872 = vmatprep.subr.bf16.mxu0 0
        %873 = vmatpush1.bf16.msra.mxu0 %v690
        %874 = vmatprep.subr.bf16.mxu0 0
        %875 = vmatpush1.bf16.msra.mxu0 %v691
        %876 = vmatprep.subr.bf16.mxu0 0
        %877 = vmatpush1.bf16.msra.mxu0 %v692
        %878 = vmatprep.subr.bf16.mxu0 0
        %879 = vmatpush1.bf16.msra.mxu0 %v693
        %880 = vmatprep.subr.bf16.mxu0 0
        %881 = vmatpush1.bf16.msra.mxu0 %v694
        %882 = vmatprep.subr.bf16.mxu0 0
        %883 = vmatpush1.bf16.msra.mxu0 %v695
        %884 = vmatprep.subr.bf16.mxu0 0
        %885 = vmatpush1.bf16.msra.mxu0 %v696
        %886 = vmatprep.subr.bf16.mxu0 0
        %887 = vmatpush1.bf16.msra.mxu0 %v697
        %888 = vmatprep.subr.bf16.mxu0 0
        %889 = vmatpush1.bf16.msra.mxu0 %v698
        %890 = vmatprep.subr.bf16.mxu0 0
        %891 = vmatpush1.bf16.msra.mxu0 %v699
        %892 = vmatprep.subr.bf16.mxu0 0
        %893 = vmatpush1.bf16.msra.mxu0 %v700
        %894 = vmatprep.mubr.bf16.mxu0 %v855
        %895 = vmatmul.mubr.bf16.gmra.mrb[0].mxu0 %v848
        %v896 = vpop.f32.mrb[0].mxu0
        %v897 = vadd.f32 0.0, %v896
        %v898 = vpop.f32.mrb[0].mxu0
        %v899 = vpop.f32.mrb[0].mxu0
        %v900 = vpop.f32.mrb[0].mxu0
        %901 = vdwg.mxu0
        %902 = vmatprep.subr.bf16.mxu0 0
        %903 = vmatpush1.bf16.msra.mxu0 %v701
        %904 = vmatprep.subr.bf16.mxu0 0
        %905 = vmatpush1.bf16.msra.mxu0 %v702
        %906 = vmatprep.subr.bf16.mxu0 0
        %907 = vmatpush1.bf16.msra.mxu0 %v703
        %908 = vmatprep.subr.bf16.mxu0 0
        %909 = vmatpush1.bf16.msra.mxu0 %v704
        %910 = vmatprep.subr.bf16.mxu0 0
        %911 = vmatpush1.bf16.msra.mxu0 %v705
        %912 = vmatprep.subr.bf16.mxu0 0
        %913 = vmatpush1.bf16.msra.mxu0 %v706
        %914 = vmatprep.subr.bf16.mxu0 0
        %915 = vmatpush1.bf16.msra.mxu0 %v707
        %916 = vmatprep.subr.bf16.mxu0 0
        %917 = vmatpush1.bf16.msra.mxu0 %v708
        %918 = vmatprep.subr.bf16.mxu0 0
        %919 = vmatpush1.bf16.msra.mxu0 %v709
        %920 = vmatprep.subr.bf16.mxu0 0
        %921 = vmatpush1.bf16.msra.mxu0 %v710
        %922 = vmatprep.subr.bf16.mxu0 0
        %923 = vmatpush1.bf16.msra.mxu0 %v711
        %924 = vmatprep.subr.bf16.mxu0 0
        %925 = vmatpush1.bf16.msra.mxu0 %v712
        %926 = vmatprep.subr.bf16.mxu0 0
        %927 = vmatpush1.bf16.msra.mxu0 %v713
        %928 = vmatprep.subr.bf16.mxu0 0
        %929 = vmatpush1.bf16.msra.mxu0 %v714
        %930 = vmatprep.subr.bf16.mxu0 0
        %931 = vmatpush1.bf16.msra.mxu0 %v715
        %932 = vmatprep.subr.bf16.mxu0 0
        %933 = vmatpush1.bf16.msra.mxu0 %v716
        %934 = vmatprep.mubr.bf16.mxu0 %v857
        %935 = vmatmul.mubr.bf16.gmra.mrb[0].mxu0 %v856
        %v936 = vpop.f32.mrb[0].mxu0
        %v937 = vadd.f32 %v897, %v936
        %v938 = vpop.f32.mrb[0].mxu0
        %v939 = vpop.f32.mrb[0].mxu0
        %v940 = vpop.f32.mrb[0].mxu0
        %941 = vdwg.mxu0
        %v942 = vadd.f32 %v831, %v937
        %943 = vst [vmem:[#allocation3] sm:$0x3] %v942
        %p944 = scmp.eq.s32.totalorder %s29, 1
        // Predicated region
        $region89: #{tpu_custom_call.1} parent=51 // pred_check
          %p945 = pneg %p944
        $region90: #{tpu_custom_call.1} parent=51 // pred_check_branch
          %947 = sbr.rel (%p945) target = $region92
        $region91: #{tpu_custom_call.1} parent=51 // pred_region
          %v948 = vld [vmem:[#allocation10] sm:$0x1]
          %v949 = vld [vmem:[#allocation12] sm:$0xff]
          %v950 = vld [vmem:[#allocation12 + $0x8] sm:$0xff]
          %v951 = vld [vmem:[#allocation12 + $0x10] sm:$0xff]
          %v952 = vld [vmem:[#allocation12 + $0x18] sm:$0xff]
          %v953 = vld [vmem:[#allocation12 + $0x20] sm:$0xff]
          %v954 = vld [vmem:[#allocation12 + $0x28] sm:$0xff]
          %v955 = vld [vmem:[#allocation12 + $0x30] sm:$0xff]
          %v956 = vld [vmem:[#allocation12 + $0x38] sm:$0xff]
          %v957 = vld [vmem:[#allocation12 + $0x40] sm:$0xff]
          %v958 = vld [vmem:[#allocation12 + $0x48] sm:$0xff]
          %v959 = vld [vmem:[#allocation12 + $0x50] sm:$0xff]
          %v960 = vld [vmem:[#allocation12 + $0x58] sm:$0xff]
          %v961 = vld [vmem:[#allocation12 + $0x60] sm:$0xff]
          %v962 = vld [vmem:[#allocation12 + $0x68] sm:$0xff]
          %v963 = vld [vmem:[#allocation12 + $0x70] sm:$0xff]
          %v964 = vld [vmem:[#allocation12 + $0x78] sm:$0xff]
          %v965 = vld [vmem:[#allocation13] sm:$0x1]
          %v966 = vld [vmem:[#allocation15] sm:$0xff]
          %v967 = vld [vmem:[#allocation15 + $0x8] sm:$0xff]
          %v968 = vld [vmem:[#allocation15 + $0x10] sm:$0xff]
          %v969 = vld [vmem:[#allocation15 + $0x18] sm:$0xff]
          %v970 = vld [vmem:[#allocation15 + $0x20] sm:$0xff]
          %v971 = vld [vmem:[#allocation15 + $0x28] sm:$0xff]
          %v972 = vld [vmem:[#allocation15 + $0x30] sm:$0xff]
          %v973 = vld [vmem:[#allocation15 + $0x38] sm:$0xff]
          %v974 = vld [vmem:[#allocation15 + $0x40] sm:$0xff]
          %v975 = vld [vmem:[#allocation15 + $0x48] sm:$0xff]
          %v976 = vld [vmem:[#allocation15 + $0x50] sm:$0xff]
          %v977 = vld [vmem:[#allocation15 + $0x58] sm:$0xff]
          %v978 = vld [vmem:[#allocation15 + $0x60] sm:$0xff]
          %v979 = vld [vmem:[#allocation15 + $0x68] sm:$0xff]
          %v980 = vld [vmem:[#allocation15 + $0x70] sm:$0xff]
          %v981 = vld [vmem:[#allocation15 + $0x78] sm:$0xff]
          %v982 = vld [vmem:[#allocation16] sm:$0x1]
          %v983 = vld [vmem:[#allocation2] sm:$0x3]
          %v985 = vlaneseq
          %v986 = vshrl.u32 %v985, 7
          %v987 = vsub.s32 0, %v986
          %v988 = vrot.slane %v948, %v987
          %v990 = vadd.f32 %v983, %v988
          %v992 = vlaneseq
          %v993 = vshrl.u32 %v992, 7
          %v994 = vsub.s32 0, %v993
          %v995 = vrot.slane %v965, %v994
          %997 = vmatprep.subr.mxu0 0.0
          %998 = vmatpush1.msra.mxu0 %v949
          %999 = vmatprep.subr.mxu0 0.0
          %1000 = vmatpush1.msra.mxu0 %v950
          %1001 = vmatprep.subr.mxu0 0.0
          %1002 = vmatpush1.msra.mxu0 %v951
          %1003 = vmatprep.subr.mxu0 0.0
          %1004 = vmatpush1.msra.mxu0 %v952
          %1005 = vmatprep.subr.mxu0 0.0
          %1006 = vmatpush1.msra.mxu0 %v953
          %1007 = vmatprep.subr.mxu0 0.0
          %1008 = vmatpush1.msra.mxu0 %v954
          %1009 = vmatprep.subr.mxu0 0.0
          %1010 = vmatpush1.msra.mxu0 %v955
          %1011 = vmatprep.subr.mxu0 0.0
          %1012 = vmatpush1.msra.mxu0 %v956
          %1013 = vmatprep.subr.mxu0 0.0
          %1014 = vmatpush1.msra.mxu0 %v957
          %1015 = vmatprep.subr.mxu0 0.0
          %1016 = vmatpush1.msra.mxu0 %v958
          %1017 = vmatprep.subr.mxu0 0.0
          %1018 = vmatpush1.msra.mxu0 %v959
          %1019 = vmatprep.subr.mxu0 0.0
          %1020 = vmatpush1.msra.mxu0 %v960
          %1021 = vmatprep.subr.mxu0 0.0
          %1022 = vmatpush1.msra.mxu0 %v961
          %1023 = vmatprep.subr.mxu0 0.0
          %1024 = vmatpush1.msra.mxu0 %v962
          %1025 = vmatprep.subr.mxu0 0.0
          %1026 = vmatpush1.msra.mxu0 %v963
          %1027 = vmatprep.subr.mxu0 0.0
          %1028 = vmatpush1.msra.mxu0 %v964
          %1029 = vmatprep.subr.mxu0 0.0
          %1030 = vmatpush1.msra.mxu0 0.0
          %1031 = vmatprep.subr.mxu0 0.0
          %1032 = vmatpush1.msra.mxu0 0.0
          %1033 = vmatprep.subr.mxu0 0.0
          %1034 = vmatpush1.msra.mxu0 0.0
          %1035 = vmatprep.subr.mxu0 0.0
          %1036 = vmatpush1.msra.mxu0 0.0
          %1037 = vmatprep.subr.mxu0 0.0
          %1038 = vmatpush1.msra.mxu0 0.0
          %1039 = vmatprep.subr.mxu0 0.0
          %1040 = vmatpush1.msra.mxu0 0.0
          %1041 = vmatprep.subr.mxu0 0.0
          %1042 = vmatpush1.msra.mxu0 0.0
          %1043 = vmatprep.subr.mxu0 0.0
          %1044 = vmatpush1.msra.mxu0 0.0
          %1045 = vmatprep.subr.mxu0 0.0
          %1046 = vmatpush1.msra.mxu0 0.0
          %1047 = vmatprep.subr.mxu0 0.0
          %1048 = vmatpush1.msra.mxu0 0.0
          %1049 = vmatprep.subr.mxu0 0.0
          %1050 = vmatpush1.msra.mxu0 0.0
          %1051 = vmatprep.subr.mxu0 0.0
          %1052 = vmatpush1.msra.mxu0 0.0
          %1053 = vmatprep.subr.mxu0 0.0
          %1054 = vmatpush1.msra.mxu0 0.0
          %1055 = vmatprep.subr.mxu0 0.0
          %1056 = vmatpush1.msra.mxu0 0.0
          %1057 = vmatprep.subr.mxu0 0.0
          %1058 = vmatpush1.msra.mxu0 0.0
          %1059 = vmatprep.subr.mxu0 0.0
          %1060 = vmatpush1.msra.mxu0 0.0
          %1061 = vmatprep.mubr.f32.mxu0 0.0
          %1062 = vmatmul.mubr.f32.gmra.mrb[0].mxu0 %v990
          %v1063 = vpop.f32.mrb[0].mxu0
          %v1064 = vadd.f32 %v995, %v1063
          %v1065 = vpop.f32.mrb[0].mxu0
          %1066 = vdwg.mxu0
          %v1067 = vmax.f32 %v1064, 0.0
          %v1069 = vlaneseq
          %v1070 = vshrl.u32 %v1069, 7
          %v1071 = vsub.s32 0, %v1070
          %v1072 = vrot.slane %v982, %v1071
          %1074 = vmatprep.subr.mxu0 0.0
          %1075 = vmatpush1.msra.mxu0 %v966
          %1076 = vmatprep.subr.mxu0 0.0
          %1077 = vmatpush1.msra.mxu0 %v967
          %1078 = vmatprep.subr.mxu0 0.0
          %1079 = vmatpush1.msra.mxu0 %v968
          %1080 = vmatprep.subr.mxu0 0.0
          %1081 = vmatpush1.msra.mxu0 %v969
          %1082 = vmatprep.subr.mxu0 0.0
          %1083 = vmatpush1.msra.mxu0 %v970
          %1084 = vmatprep.subr.mxu0 0.0
          %1085 = vmatpush1.msra.mxu0 %v971
          %1086 = vmatprep.subr.mxu0 0.0
          %1087 = vmatpush1.msra.mxu0 %v972
          %1088 = vmatprep.subr.mxu0 0.0
          %1089 = vmatpush1.msra.mxu0 %v973
          %1090 = vmatprep.subr.mxu0 0.0
          %1091 = vmatpush1.msra.mxu0 %v974
          %1092 = vmatprep.subr.mxu0 0.0
          %1093 = vmatpush1.msra.mxu0 %v975
          %1094 = vmatprep.subr.mxu0 0.0
          %1095 = vmatpush1.msra.mxu0 %v976
          %1096 = vmatprep.subr.mxu0 0.0
          %1097 = vmatpush1.msra.mxu0 %v977
          %1098 = vmatprep.subr.mxu0 0.0
          %1099 = vmatpush1.msra.mxu0 %v978
          %1100 = vmatprep.subr.mxu0 0.0
          %1101 = vmatpush1.msra.mxu0 %v979
          %1102 = vmatprep.subr.mxu0 0.0
          %1103 = vmatpush1.msra.mxu0 %v980
          %1104 = vmatprep.subr.mxu0 0.0
          %1105 = vmatpush1.msra.mxu0 %v981
          %1106 = vmatprep.subr.mxu0 0.0
          %1107 = vmatpush1.msra.mxu0 0.0
          %1108 = vmatprep.subr.mxu0 0.0
          %1109 = vmatpush1.msra.mxu0 0.0
          %1110 = vmatprep.subr.mxu0 0.0
          %1111 = vmatpush1.msra.mxu0 0.0
          %1112 = vmatprep.subr.mxu0 0.0
          %1113 = vmatpush1.msra.mxu0 0.0
          %1114 = vmatprep.subr.mxu0 0.0
          %1115 = vmatpush1.msra.mxu0 0.0
          %1116 = vmatprep.subr.mxu0 0.0
          %1117 = vmatpush1.msra.mxu0 0.0
          %1118 = vmatprep.subr.mxu0 0.0
          %1119 = vmatpush1.msra.mxu0 0.0
          %1120 = vmatprep.subr.mxu0 0.0
          %1121 = vmatpush1.msra.mxu0 0.0
          %1122 = vmatprep.subr.mxu0 0.0
          %1123 = vmatpush1.msra.mxu0 0.0
          %1124 = vmatprep.subr.mxu0 0.0
          %1125 = vmatpush1.msra.mxu0 0.0
          %1126 = vmatprep.subr.mxu0 0.0
          %1127 = vmatpush1.msra.mxu0 0.0
          %1128 = vmatprep.subr.mxu0 0.0
          %1129 = vmatpush1.msra.mxu0 0.0
          %1130 = vmatprep.subr.mxu0 0.0
          %1131 = vmatpush1.msra.mxu0 0.0
          %1132 = vmatprep.subr.mxu0 0.0
          %1133 = vmatpush1.msra.mxu0 0.0
          %1134 = vmatprep.subr.mxu0 0.0
          %1135 = vmatpush1.msra.mxu0 0.0
          %1136 = vmatprep.subr.mxu0 0.0
          %1137 = vmatpush1.msra.mxu0 0.0
          %1138 = vmatprep.mubr.f32.mxu0 0.0
          %1139 = vmatmul.mubr.f32.gmra.mrb[0].mxu0 %v1067
          %v1140 = vpop.f32.mrb[0].mxu0
          %v1141 = vadd.f32 %v1072, %v1140
          %v1142 = vpop.f32.mrb[0].mxu0
          %1143 = vdwg.mxu0
          %v1144 = vmul.f32 %v1141, %v1141
          %vm1145 = vcmask 1041408
          %v1146 = vsel %vm1145, %v1144, 0.0
          %1147 = vadd.xlane.f32.xlu0 %v1146
          %v1148 = vpop.xlane.xlu0 %1147
          %v1149 = vmax.f32 %v1148, 1e-24
          %v1150 = vrsqrt.pop %v1149
          %v1151 = vmul.f32 %v1141, %v1150
          %v1152 = vld [vmem:[#allocation3] sm:$0x3]
          %v1153 = vadd.f32 %v1152, %v988
          %1154 = vmatprep.subr.mxu0 0.0
          %1155 = vmatpush1.msra.mxu0 %v949
          %1156 = vmatprep.subr.mxu0 0.0
          %1157 = vmatpush1.msra.mxu0 %v950
          %1158 = vmatprep.subr.mxu0 0.0
          %1159 = vmatpush1.msra.mxu0 %v951
          %1160 = vmatprep.subr.mxu0 0.0
          %1161 = vmatpush1.msra.mxu0 %v952
          %1162 = vmatprep.subr.mxu0 0.0
          %1163 = vmatpush1.msra.mxu0 %v953
          %1164 = vmatprep.subr.mxu0 0.0
          %1165 = vmatpush1.msra.mxu0 %v954
          %1166 = vmatprep.subr.mxu0 0.0
          %1167 = vmatpush1.msra.mxu0 %v955
          %1168 = vmatprep.subr.mxu0 0.0
          %1169 = vmatpush1.msra.mxu0 %v956
          %1170 = vmatprep.subr.mxu0 0.0
          %1171 = vmatpush1.msra.mxu0 %v957
          %1172 = vmatprep.subr.mxu0 0.0
          %1173 = vmatpush1.msra.mxu0 %v958
          %1174 = vmatprep.subr.mxu0 0.0
          %1175 = vmatpush1.msra.mxu0 %v959
          %1176 = vmatprep.subr.mxu0 0.0
          %1177 = vmatpush1.msra.mxu0 %v960
          %1178 = vmatprep.subr.mxu0 0.0
          %1179 = vmatpush1.msra.mxu0 %v961
          %1180 = vmatprep.subr.mxu0 0.0
          %1181 = vmatpush1.msra.mxu0 %v962
          %1182 = vmatprep.subr.mxu0 0.0
          %1183 = vmatpush1.msra.mxu0 %v963
          %1184 = vmatprep.subr.mxu0 0.0
          %1185 = vmatpush1.msra.mxu0 %v964
          %1186 = vmatprep.subr.mxu0 0.0
          %1187 = vmatpush1.msra.mxu0 0.0
          %1188 = vmatprep.subr.mxu0 0.0
          %1189 = vmatpush1.msra.mxu0 0.0
          %1190 = vmatprep.subr.mxu0 0.0
          %1191 = vmatpush1.msra.mxu0 0.0
          %1192 = vmatprep.subr.mxu0 0.0
          %1193 = vmatpush1.msra.mxu0 0.0
          %1194 = vmatprep.subr.mxu0 0.0
          %1195 = vmatpush1.msra.mxu0 0.0
          %1196 = vmatprep.subr.mxu0 0.0
          %1197 = vmatpush1.msra.mxu0 0.0
          %1198 = vmatprep.subr.mxu0 0.0
          %1199 = vmatpush1.msra.mxu0 0.0
          %1200 = vmatprep.subr.mxu0 0.0
          %1201 = vmatpush1.msra.mxu0 0.0
          %1202 = vmatprep.subr.mxu0 0.0
          %1203 = vmatpush1.msra.mxu0 0.0
          %1204 = vmatprep.subr.mxu0 0.0
          %1205 = vmatpush1.msra.mxu0 0.0
          %1206 = vmatprep.subr.mxu0 0.0
          %1207 = vmatpush1.msra.mxu0 0.0
          %1208 = vmatprep.subr.mxu0 0.0
          %1209 = vmatpush1.msra.mxu0 0.0
          %1210 = vmatprep.subr.mxu0 0.0
          %1211 = vmatpush1.msra.mxu0 0.0
          %1212 = vmatprep.subr.mxu0 0.0
          %1213 = vmatpush1.msra.mxu0 0.0
          %1214 = vmatprep.subr.mxu0 0.0
          %1215 = vmatpush1.msra.mxu0 0.0
          %1216 = vmatprep.subr.mxu0 0.0
          %1217 = vmatpush1.msra.mxu0 0.0
          %1218 = vmatprep.mubr.f32.mxu0 0.0
          %1219 = vmatmul.mubr.f32.gmra.mrb[0].mxu0 %v1153
          %v1220 = vpop.f32.mrb[0].mxu0
          %v1221 = vadd.f32 %v995, %v1220
          %v1222 = vpop.f32.mrb[0].mxu0
          %1223 = vdwg.mxu0
          %v1224 = vmax.f32 %v1221, 0.0
          %1225 = vmatprep.subr.mxu0 0.0
          %1226 = vmatpush1.msra.mxu0 %v966
          %1227 = vmatprep.subr.mxu0 0.0
          %1228 = vmatpush1.msra.mxu0 %v967
          %1229 = vmatprep.subr.mxu0 0.0
          %1230 = vmatpush1.msra.mxu0 %v968
          %1231 = vmatprep.subr.mxu0 0.0
          %1232 = vmatpush1.msra.mxu0 %v969
          %1233 = vmatprep.subr.mxu0 0.0
          %1234 = vmatpush1.msra.mxu0 %v970
          %1235 = vmatprep.subr.mxu0 0.0
          %1236 = vmatpush1.msra.mxu0 %v971
          %1237 = vmatprep.subr.mxu0 0.0
          %1238 = vmatpush1.msra.mxu0 %v972
          %1239 = vmatprep.subr.mxu0 0.0
          %1240 = vmatpush1.msra.mxu0 %v973
          %1241 = vmatprep.subr.mxu0 0.0
          %1242 = vmatpush1.msra.mxu0 %v974
          %1243 = vmatprep.subr.mxu0 0.0
          %1244 = vmatpush1.msra.mxu0 %v975
          %1245 = vmatprep.subr.mxu0 0.0
          %1246 = vmatpush1.msra.mxu0 %v976
          %1247 = vmatprep.subr.mxu0 0.0
          %1248 = vmatpush1.msra.mxu0 %v977
          %1249 = vmatprep.subr.mxu0 0.0
          %1250 = vmatpush1.msra.mxu0 %v978
          %1251 = vmatprep.subr.mxu0 0.0
          %1252 = vmatpush1.msra.mxu0 %v979
          %1253 = vmatprep.subr.mxu0 0.0
          %1254 = vmatpush1.msra.mxu0 %v980
          %1255 = vmatprep.subr.mxu0 0.0
          %1256 = vmatpush1.msra.mxu0 %v981
          %1257 = vmatprep.subr.mxu0 0.0
          %1258 = vmatpush1.msra.mxu0 0.0
          %1259 = vmatprep.subr.mxu0 0.0
          %1260 = vmatpush1.msra.mxu0 0.0
          %1261 = vmatprep.subr.mxu0 0.0
          %1262 = vmatpush1.msra.mxu0 0.0
          %1263 = vmatprep.subr.mxu0 0.0
          %1264 = vmatpush1.msra.mxu0 0.0
          %1265 = vmatprep.subr.mxu0 0.0
          %1266 = vmatpush1.msra.mxu0 0.0
          %1267 = vmatprep.subr.mxu0 0.0
          %1268 = vmatpush1.msra.mxu0 0.0
          %1269 = vmatprep.subr.mxu0 0.0
          %1270 = vmatpush1.msra.mxu0 0.0
          %1271 = vmatprep.subr.mxu0 0.0
          %1272 = vmatpush1.msra.mxu0 0.0
          %1273 = vmatprep.subr.mxu0 0.0
          %1274 = vmatpush1.msra.mxu0 0.0
          %1275 = vmatprep.subr.mxu0 0.0
          %1276 = vmatpush1.msra.mxu0 0.0
          %1277 = vmatprep.subr.mxu0 0.0
          %1278 = vmatpush1.msra.mxu0 0.0
          %1279 = vmatprep.subr.mxu0 0.0
          %1280 = vmatpush1.msra.mxu0 0.0
          %1281 = vmatprep.subr.mxu0 0.0
          %1282 = vmatpush1.msra.mxu0 0.0
          %1283 = vmatprep.subr.mxu0 0.0
          %1284 = vmatpush1.msra.mxu0 0.0
          %1285 = vmatprep.subr.mxu0 0.0
          %1286 = vmatpush1.msra.mxu0 0.0
          %1287 = vmatprep.subr.mxu0 0.0
          %1288 = vmatpush1.msra.mxu0 0.0
          %1289 = vmatprep.mubr.f32.mxu0 0.0
          %1290 = vmatmul.mubr.f32.gmra.mrb[0].mxu0 %v1224
          %v1291 = vpop.f32.mrb[0].mxu0
          %v1292 = vadd.f32 %v1072, %v1291
          %v1293 = vpop.f32.mrb[0].mxu0
          %1294 = vdwg.mxu0
          %v1295 = vmul.f32 %v1292, %v1292
          %v1296 = vsel %vm1145, %v1295, 0.0
          %1297 = vadd.xlane.f32.xlu0 %v1296
          %v1298 = vpop.xlane.xlu0 %1297
          %v1299 = vmax.f32 %v1298, 1e-24
          %v1300 = vrsqrt.pop %v1299
          %v1301 = vmul.f32 %v1292, %v1300
          %1302 = vmatprep.subr.mxu0 0.0
          %1303 = vmatpush1.xpose.msra.mxu0 %v1151
          %1304 = vmatprep.subr.mxu0 0.0
          %1305 = vmatpush1.xpose.msra.mxu0 0.0
          %1306 = vmatprep.subr.mxu0 0.0
          %1307 = vmatpush1.xpose.msra.mxu0 0.0
          %1308 = vmatprep.subr.mxu0 0.0
          %1309 = vmatpush1.xpose.msra.mxu0 0.0
          %1310 = vmatprep.subr.mxu0 0.0
          %1311 = vmatpush1.xpose.msra.mxu0 0.0
          %1312 = vmatprep.subr.mxu0 0.0
          %1313 = vmatpush1.xpose.msra.mxu0 0.0
          %1314 = vmatprep.subr.mxu0 0.0
          %1315 = vmatpush1.xpose.msra.mxu0 0.0
          %1316 = vmatprep.subr.mxu0 0.0
          %1317 = vmatpush1.xpose.msra.mxu0 0.0
          %1318 = vmatprep.subr.mxu0 0.0
          %1319 = vmatpush1.xpose.msra.mxu0 0.0
          %1320 = vmatprep.subr.mxu0 0.0
          %1321 = vmatpush1.xpose.msra.mxu0 0.0
          %1322 = vmatprep.subr.mxu0 0.0
          %1323 = vmatpush1.xpose.msra.mxu0 0.0
          %1324 = vmatprep.subr.mxu0 0.0
          %1325 = vmatpush1.xpose.msra.mxu0 0.0
          %1326 = vmatprep.subr.mxu0 0.0
          %1327 = vmatpush1.xpose.msra.mxu0 0.0
          %1328 = vmatprep.subr.mxu0 0.0
          %1329 = vmatpush1.xpose.msra.mxu0 0.0
          %1330 = vmatprep.subr.mxu0 0.0
          %1331 = vmatpush1.xpose.msra.mxu0 0.0
          %1332 = vmatprep.subr.mxu0 0.0
          %1333 = vmatpush1.xpose.msra.mxu0 0.0
          %1334 = vmatprep.subr.mxu0 0.0
          %1335 = vmatpush1.xpose.msra.mxu0 0.0
          %1336 = vmatprep.subr.mxu0 0.0
          %1337 = vmatpush1.xpose.msra.mxu0 0.0
          %1338 = vmatprep.subr.mxu0 0.0
          %1339 = vmatpush1.xpose.msra.mxu0 0.0
          %1340 = vmatprep.subr.mxu0 0.0
          %1341 = vmatpush1.xpose.msra.mxu0 0.0
          %1342 = vmatprep.subr.mxu0 0.0
          %1343 = vmatpush1.xpose.msra.mxu0 0.0
          %1344 = vmatprep.subr.mxu0 0.0
          %1345 = vmatpush1.xpose.msra.mxu0 0.0
          %1346 = vmatprep.subr.mxu0 0.0
          %1347 = vmatpush1.xpose.msra.mxu0 0.0
          %1348 = vmatprep.subr.mxu0 0.0
          %1349 = vmatpush1.xpose.msra.mxu0 0.0
          %1350 = vmatprep.subr.mxu0 0.0
          %1351 = vmatpush1.xpose.msra.mxu0 0.0
          %1352 = vmatprep.subr.mxu0 0.0
          %1353 = vmatpush1.xpose.msra.mxu0 0.0
          %1354 = vmatprep.subr.mxu0 0.0
          %1355 = vmatpush1.xpose.msra.mxu0 0.0
          %1356 = vmatprep.subr.mxu0 0.0
          %1357 = vmatpush1.xpose.msra.mxu0 0.0
          %1358 = vmatprep.subr.mxu0 0.0
          %1359 = vmatpush1.xpose.msra.mxu0 0.0
          %1360 = vmatprep.subr.mxu0 0.0
          %1361 = vmatpush1.xpose.msra.mxu0 0.0
          %1362 = vmatprep.subr.mxu0 0.0
          %1363 = vmatpush1.xpose.msra.mxu0 0.0
          %1364 = vmatprep.subr.mxu0 0.0
          %1365 = vmatpush1.xpose.msra.mxu0 0.0
          %1366 = vmatprep.mubr.f32.mxu0 0.0
          %1367 = vmatmul.mubr.f32.gmra.mrb[0].mxu0 %v1151
          %v1368 = vpop.f32.mrb[0].mxu0
          %v1369 = vadd.f32 0.0, %v1368
          %v1370 = vpop.f32.mrb[0].mxu0
          %1371 = vdwg.mxu0
          %v1372 = vmul.f32 %v1369, 2.0
          %1373 = vmatprep.subr.mxu0 0.0
          %1374 = vmatpush1.xpose.msra.mxu0 %v1301
          %1375 = vmatprep.subr.mxu0 0.0
          %1376 = vmatpush1.xpose.msra.mxu0 0.0
          %1377 = vmatprep.subr.mxu0 0.0
          %1378 = vmatpush1.xpose.msra.mxu0 0.0
          %1379 = vmatprep.subr.mxu0 0.0
          %1380 = vmatpush1.xpose.msra.mxu0 0.0
          %1381 = vmatprep.subr.mxu0 0.0
          %1382 = vmatpush1.xpose.msra.mxu0 0.0
          %1383 = vmatprep.subr.mxu0 0.0
          %1384 = vmatpush1.xpose.msra.mxu0 0.0
          %1385 = vmatprep.subr.mxu0 0.0
          %1386 = vmatpush1.xpose.msra.mxu0 0.0
          %1387 = vmatprep.subr.mxu0 0.0
          %1388 = vmatpush1.xpose.msra.mxu0 0.0
          %1389 = vmatprep.subr.mxu0 0.0
          %1390 = vmatpush1.xpose.msra.mxu0 0.0
          %1391 = vmatprep.subr.mxu0 0.0
          %1392 = vmatpush1.xpose.msra.mxu0 0.0
          %1393 = vmatprep.subr.mxu0 0.0
          %1394 = vmatpush1.xpose.msra.mxu0 0.0
          %1395 = vmatprep.subr.mxu0 0.0
          %1396 = vmatpush1.xpose.msra.mxu0 0.0
          %1397 = vmatprep.subr.mxu0 0.0
          %1398 = vmatpush1.xpose.msra.mxu0 0.0
          %1399 = vmatprep.subr.mxu0 0.0
          %1400 = vmatpush1.xpose.msra.mxu0 0.0
          %1401 = vmatprep.subr.mxu0 0.0
          %1402 = vmatpush1.xpose.msra.mxu0 0.0
          %1403 = vmatprep.subr.mxu0 0.0
          %1404 = vmatpush1.xpose.msra.mxu0 0.0
          %1405 = vmatprep.subr.mxu0 0.0
          %1406 = vmatpush1.xpose.msra.mxu0 0.0
          %1407 = vmatprep.subr.mxu0 0.0
          %1408 = vmatpush1.xpose.msra.mxu0 0.0
          %1409 = vmatprep.subr.mxu0 0.0
          %1410 = vmatpush1.xpose.msra.mxu0 0.0
          %1411 = vmatprep.subr.mxu0 0.0
          %1412 = vmatpush1.xpose.msra.mxu0 0.0
          %1413 = vmatprep.subr.mxu0 0.0
          %1414 = vmatpush1.xpose.msra.mxu0 0.0
          %1415 = vmatprep.subr.mxu0 0.0
          %1416 = vmatpush1.xpose.msra.mxu0 0.0
          %1417 = vmatprep.subr.mxu0 0.0
          %1418 = vmatpush1.xpose.msra.mxu0 0.0
          %1419 = vmatprep.subr.mxu0 0.0
          %1420 = vmatpush1.xpose.msra.mxu0 0.0
          %1421 = vmatprep.subr.mxu0 0.0
          %1422 = vmatpush1.xpose.msra.mxu0 0.0
          %1423 = vmatprep.subr.mxu0 0.0
          %1424 = vmatpush1.xpose.msra.mxu0 0.0
          %1425 = vmatprep.subr.mxu0 0.0
          %1426 = vmatpush1.xpose.msra.mxu0 0.0
          %1427 = vmatprep.subr.mxu0 0.0
          %1428 = vmatpush1.xpose.msra.mxu0 0.0
          %1429 = vmatprep.subr.mxu0 0.0
          %1430 = vmatpush1.xpose.msra.mxu0 0.0
          %1431 = vmatprep.subr.mxu0 0.0
          %1432 = vmatpush1.xpose.msra.mxu0 0.0
          %1433 = vmatprep.subr.mxu0 0.0
          %1434 = vmatpush1.xpose.msra.mxu0 0.0
          %1435 = vmatprep.subr.mxu0 0.0
          %1436 = vmatpush1.xpose.msra.mxu0 0.0
          %1437 = vmatprep.mubr.f32.mxu0 0.0
          %1438 = vmatmul.mubr.f32.gmra.mrb[0].mxu0 %v1151
          %v1439 = vpop.f32.mrb[0].mxu0
          %v1440 = vadd.f32 0.0, %v1439
          %v1441 = vpop.f32.mrb[0].mxu0
          %1442 = vdwg.mxu0
          %v1443 = vmul.f32 %v1440, 2.0
          %1444 = vmatprep.subr.mxu0 0.0
          %1445 = vmatpush1.xpose.msra.mxu0 %v1151
          %1446 = vmatprep.subr.mxu0 0.0
          %1447 = vmatpush1.xpose.msra.mxu0 0.0
          %1448 = vmatprep.subr.mxu0 0.0
          %1449 = vmatpush1.xpose.msra.mxu0 0.0
          %1450 = vmatprep.subr.mxu0 0.0
          %1451 = vmatpush1.xpose.msra.mxu0 0.0
          %1452 = vmatprep.subr.mxu0 0.0
          %1453 = vmatpush1.xpose.msra.mxu0 0.0
          %1454 = vmatprep.subr.mxu0 0.0
          %1455 = vmatpush1.xpose.msra.mxu0 0.0
          %1456 = vmatprep.subr.mxu0 0.0
          %1457 = vmatpush1.xpose.msra.mxu0 0.0
          %1458 = vmatprep.subr.mxu0 0.0
          %1459 = vmatpush1.xpose.msra.mxu0 0.0
          %1460 = vmatprep.subr.mxu0 0.0
          %1461 = vmatpush1.xpose.msra.mxu0 0.0
          %1462 = vmatprep.subr.mxu0 0.0
          %1463 = vmatpush1.xpose.msra.mxu0 0.0
          %1464 = vmatprep.subr.mxu0 0.0
          %1465 = vmatpush1.xpose.msra.mxu0 0.0
          %1466 = vmatprep.subr.mxu0 0.0
          %1467 = vmatpush1.xpose.msra.mxu0 0.0
          %1468 = vmatprep.subr.mxu0 0.0
          %1469 = vmatpush1.xpose.msra.mxu0 0.0
          %1470 = vmatprep.subr.mxu0 0.0
          %1471 = vmatpush1.xpose.msra.mxu0 0.0
          %1472 = vmatprep.subr.mxu0 0.0
          %1473 = vmatpush1.xpose.msra.mxu0 0.0
          %1474 = vmatprep.subr.mxu0 0.0
          %1475 = vmatpush1.xpose.msra.mxu0 0.0
          %1476 = vmatprep.subr.mxu0 0.0
          %1477 = vmatpush1.xpose.msra.mxu0 0.0
          %1478 = vmatprep.subr.mxu0 0.0
          %1479 = vmatpush1.xpose.msra.mxu0 0.0
          %1480 = vmatprep.subr.mxu0 0.0
          %1481 = vmatpush1.xpose.msra.mxu0 0.0
          %1482 = vmatprep.subr.mxu0 0.0
          %1483 = vmatpush1.xpose.msra.mxu0 0.0
          %1484 = vmatprep.subr.mxu0 0.0
          %1485 = vmatpush1.xpose.msra.mxu0 0.0
          %1486 = vmatprep.subr.mxu0 0.0
          %1487 = vmatpush1.xpose.msra.mxu0 0.0
          %1488 = vmatprep.subr.mxu0 0.0
          %1489 = vmatpush1.xpose.msra.mxu0 0.0
          %1490 = vmatprep.subr.mxu0 0.0
          %1491 = vmatpush1.xpose.msra.mxu0 0.0
          %1492 = vmatprep.subr.mxu0 0.0
          %1493 = vmatpush1.xpose.msra.mxu0 0.0
          %1494 = vmatprep.subr.mxu0 0.0
          %1495 = vmatpush1.xpose.msra.mxu0 0.0
          %1496 = vmatprep.subr.mxu0 0.0
          %1497 = vmatpush1.xpose.msra.mxu0 0.0
          %1498 = vmatprep.subr.mxu0 0.0
          %1499 = vmatpush1.xpose.msra.mxu0 0.0
          %1500 = vmatprep.subr.mxu0 0.0
          %1501 = vmatpush1.xpose.msra.mxu0 0.0
          %1502 = vmatprep.subr.mxu0 0.0
          %1503 = vmatpush1.xpose.msra.mxu0 0.0
          %1504 = vmatprep.subr.mxu0 0.0
          %1505 = vmatpush1.xpose.msra.mxu0 0.0
          %1506 = vmatprep.subr.mxu0 0.0
          %1507 = vmatpush1.xpose.msra.mxu0 0.0
          %1508 = vmatprep.mubr.f32.mxu0 0.0
          %1509 = vmatmul.mubr.f32.gmra.mrb[0].mxu0 %v1301
          %v1510 = vpop.f32.mrb[0].mxu0
          %v1511 = vadd.f32 0.0, %v1510
          %v1512 = vpop.f32.mrb[0].mxu0
          %1513 = vdwg.mxu0
          %v1514 = vmul.f32 %v1511, 2.0
          %1515 = vmatprep.subr.mxu0 0.0
          %1516 = vmatpush1.xpose.msra.mxu0 %v1301
          %1517 = vmatprep.subr.mxu0 0.0
          %1518 = vmatpush1.xpose.msra.mxu0 0.0
          %1519 = vmatprep.subr.mxu0 0.0
          %1520 = vmatpush1.xpose.msra.mxu0 0.0
          %1521 = vmatprep.subr.mxu0 0.0
          %1522 = vmatpush1.xpose.msra.mxu0 0.0
          %1523 = vmatprep.subr.mxu0 0.0
          %1524 = vmatpush1.xpose.msra.mxu0 0.0
          %1525 = vmatprep.subr.mxu0 0.0
          %1526 = vmatpush1.xpose.msra.mxu0 0.0
          %1527 = vmatprep.subr.mxu0 0.0
          %1528 = vmatpush1.xpose.msra.mxu0 0.0
          %1529 = vmatprep.subr.mxu0 0.0
          %1530 = vmatpush1.xpose.msra.mxu0 0.0
          %1531 = vmatprep.subr.mxu0 0.0
          %1532 = vmatpush1.xpose.msra.mxu0 0.0
          %1533 = vmatprep.subr.mxu0 0.0
          %1534 = vmatpush1.xpose.msra.mxu0 0.0
          %1535 = vmatprep.subr.mxu0 0.0
          %1536 = vmatpush1.xpose.msra.mxu0 0.0
          %1537 = vmatprep.subr.mxu0 0.0
          %1538 = vmatpush1.xpose.msra.mxu0 0.0
          %1539 = vmatprep.subr.mxu0 0.0
          %1540 = vmatpush1.xpose.msra.mxu0 0.0
          %1541 = vmatprep.subr.mxu0 0.0
          %1542 = vmatpush1.xpose.msra.mxu0 0.0
          %1543 = vmatprep.subr.mxu0 0.0
          %1544 = vmatpush1.xpose.msra.mxu0 0.0
          %1545 = vmatprep.subr.mxu0 0.0
          %1546 = vmatpush1.xpose.msra.mxu0 0.0
          %1547 = vmatprep.subr.mxu0 0.0
          %1548 = vmatpush1.xpose.msra.mxu0 0.0
          %1549 = vmatprep.subr.mxu0 0.0
          %1550 = vmatpush1.xpose.msra.mxu0 0.0
          %1551 = vmatprep.subr.mxu0 0.0
          %1552 = vmatpush1.xpose.msra.mxu0 0.0
          %1553 = vmatprep.subr.mxu0 0.0
          %1554 = vmatpush1.xpose.msra.mxu0 0.0
          %1555 = vmatprep.subr.mxu0 0.0
          %1556 = vmatpush1.xpose.msra.mxu0 0.0
          %1557 = vmatprep.subr.mxu0 0.0
          %1558 = vmatpush1.xpose.msra.mxu0 0.0
          %1559 = vmatprep.subr.mxu0 0.0
          %1560 = vmatpush1.xpose.msra.mxu0 0.0
          %1561 = vmatprep.subr.mxu0 0.0
          %1562 = vmatpush1.xpose.msra.mxu0 0.0
          %1563 = vmatprep.subr.mxu0 0.0
          %1564 = vmatpush1.xpose.msra.mxu0 0.0
          %1565 = vmatprep.subr.mxu0 0.0
          %1566 = vmatpush1.xpose.msra.mxu0 0.0
          %1567 = vmatprep.subr.mxu0 0.0
          %1568 = vmatpush1.xpose.msra.mxu0 0.0
          %1569 = vmatprep.subr.mxu0 0.0
          %1570 = vmatpush1.xpose.msra.mxu0 0.0
          %1571 = vmatprep.subr.mxu0 0.0
          %1572 = vmatpush1.xpose.msra.mxu0 0.0
          %1573 = vmatprep.subr.mxu0 0.0
          %1574 = vmatpush1.xpose.msra.mxu0 0.0
          %1575 = vmatprep.subr.mxu0 0.0
          %1576 = vmatpush1.xpose.msra.mxu0 0.0
          %1577 = vmatprep.subr.mxu0 0.0
          %1578 = vmatpush1.xpose.msra.mxu0 0.0
          %1579 = vmatprep.mubr.f32.mxu0 0.0
          %1580 = vmatmul.mubr.f32.gmra.mrb[0].mxu0 %v1301
          %v1581 = vpop.f32.mrb[0].mxu0
          %v1582 = vadd.f32 0.0, %v1581
          %v1583 = vpop.f32.mrb[0].mxu0
          %1584 = vdwg.mxu0
          %v1585 = vmul.f32 %v1582, 2.0
          %v1586 = vlaneseq
          %v1587 = vshrl.u32 %v1586, 7
          %v1588 = vlaneseq
          %v1589 = vand.u32 %v1588, 127
          %vm1590 = vcmp.ne.s32.totalorder %v1587, %v1589
          %v1591 = vsel %vm1590, %v1372, -1e+30
          %v1592 = vsel %vm1590, %v1585, -1e+30
          %v1593 = vmul.f32 %v1151, %v1301
          %v1594 = vsel %vm1145, %v1593, 0.0
          %1595 = vadd.xlane.f32.xlu0 %v1594
          %v1596 = vpop.xlane.xlu0 %1595
          %v1597 = vmul.f32 %v1596, 2.0
          %vm1598 = vcmask 9216
          %v1599 = vsel %vm1598, %v1591, -inf
          %1600 = vmax.xlane.f32.xlu0 %v1599
          %v1601 = vpop.xlane.xlu0 %1600
          %v1602 = vsel %vm1598, %v1443, -inf
          %1603 = vmax.xlane.f32.xlu0 %v1602
          %v1604 = vpop.xlane.xlu0 %1603
          %v1605 = vmax.f32 %v1601, %v1604
          %v1606 = vsub.f32 %v1591, %v1605
          %v1607 = vmul.f32 %v1606, 1.442695
          %v1608 = vpow.pop %v1607
          %v1609 = vsel %vm1598, %v1608, 0.0
          %1610 = vadd.xlane.f32.xlu0 %v1609
          %v1611 = vpop.xlane.xlu0 %1610
          %v1612 = vsub.f32 %v1443, %v1605
          %v1613 = vmul.f32 %v1612, 1.442695
          %v1614 = vpow.pop %v1613
          %v1615 = vsel %vm1598, %v1614, 0.0
          %1616 = vadd.xlane.f32.xlu0 %v1615
          %v1617 = vpop.xlane.xlu0 %1616
          %v1618 = vadd.f32 %v1611, %v1617
          %v1619 = vlog2.pop %v1618
          %v1620 = vmul.f32 %v1619, 0.6931472
          %v1621 = vadd.f32 %v1605, %v1620
          %v1622 = vsel %vm1598, %v1592, -inf
          %1623 = vmax.xlane.f32.xlu0 %v1622
          %v1624 = vpop.xlane.xlu0 %1623
          %v1625 = vsel %vm1598, %v1514, -inf
          %1626 = vmax.xlane.f32.xlu0 %v1625
          %v1627 = vpop.xlane.xlu0 %1626
          %v1628 = vmax.f32 %v1624, %v1627
          %v1629 = vsub.f32 %v1592, %v1628
          %v1630 = vmul.f32 %v1629, 1.442695
          %v1631 = vpow.pop %v1630
          %v1632 = vsel %vm1598, %v1631, 0.0
          %1633 = vadd.xlane.f32.xlu0 %v1632
          %v1634 = vpop.xlane.xlu0 %1633
          %v1635 = vsub.f32 %v1514, %v1628
          %v1636 = vmul.f32 %v1635, 1.442695
          %v1637 = vpow.pop %v1636
          %v1638 = vsel %vm1598, %v1637, 0.0
          %1639 = vadd.xlane.f32.xlu0 %v1638
          %v1640 = vpop.xlane.xlu0 %1639
          %v1641 = vadd.f32 %v1634, %v1640
          %v1642 = vlog2.pop %v1641
          %v1643 = vmul.f32 %v1642, 0.6931472
          %v1644 = vadd.f32 %v1628, %v1643
          %v1645 = vsub.f32 %v1621, %v1597
          %v1646 = vsub.f32 %v1644, %v1597
          %v1647 = vadd.f32 %v1645, %v1646
          %v1648 = vsel %vm1145, %v1647, 0.0
          %v1649 = vrot.slane %v1648, 4
          %v1650 = vadd.f32 %v1648, %v1649
          %v1651 = vrot.slane %v1650, 2
          %v1652 = vadd.f32 %v1650, %v1651
          %v1653 = vrot.slane %v1652, 1
          %v1654 = vadd.f32 %v1652, %v1653
          %v1655 = vrcp.pop 4.0
          %v1656 = vmul.f32 %v1654, %v1655
          %vm1657 = vcmask 0
          %1658 = vst.msk [vmem:[#allocation18] sm:$0x1] %vm1657, %v1656
        $region92: #{tpu_custom_call.1} parent=51 // pred_fallthru
          _
        // Predicated region
        $region93: #{tpu_custom_call.1} parent=51 // pred_check
          %p1659 = pneg %p225
        $region94: #{tpu_custom_call.1} parent=51 // pred_check_branch
          %1661 = sbr.rel (%p1659) target = $region96
        $region95: #{tpu_custom_call.1} parent=51 // pred_region
          %s1663 = ssub.s32 16, 16
          %1664 = vsyncadd [#allocation6], %s1663
          %s1666 = sshll.u32 [#allocation18], 4
          %s1667 = int_to_ptr.vmem [resolvable:$true] %s1666
          %1669 = dma.vmem_to_hbm [thread:$0]  %s1667, 16, %s8, [#allocation6]
        $region96: #{tpu_custom_call.1} parent=51 // pred_fallthru
          _
        // Predicated region
        $region97: #{tpu_custom_call.1} parent=51 // pred_check
          %p1670 = pneg %p225
        $region98: #{tpu_custom_call.1} parent=51 // pred_check_branch
          %1672 = sbr.rel (%p1670) target = $region100
        $region99: #{tpu_custom_call.1} parent=51 // pred_region
          %1673 = dma.done [#allocation6], 16
        $region100: #{tpu_custom_call.1} parent=51 // pred_fallthru
          _
      $region52: #{tpu_custom_call.1} parent=5 // pred_fallthru
        _
      %p1674 = scmp.le.s32.totalorder 2, %s24
      // Predicated region
      $region101: #{tpu_custom_call.1} parent=5 // pred_check
        %p1675 = pneg %p1674
      $region102: #{tpu_custom_call.1} parent=5 // pred_check_branch
        %1677 = sbr.rel (%p1675) target = $region104
      $region103: #{tpu_custom_call.1} parent=5 // pred_region
        %s1678 = ssub.s32 %s24, 2
      $region104: #{tpu_custom_call.1} parent=5 // pred_fallthru
        _
    $region6: #{tpu_custom_call.1} parent=1 // loop_footer
      %s28 = sadd.s32 1, %s24
    $region7: #{tpu_custom_call.1} parent=1 // loop_footer_branch
      %23 = sbr.rel target = $region3
    $region8: #{tpu_custom_call.1} parent=1 // loop_exit
      _
    %1679 = vsyncpa [#allocation5], 1
    %s1680 = scalar_lea.sflag [#allocation5], 1
    %1681 = vsyncpa %s1680, 1
    %1682 = vsyncpa [#allocation8], 1
    %s1683 = scalar_lea.sflag [#allocation8], 1
    %1684 = vsyncpa %s1683, 1
    %1685 = vsyncpa [#allocation11], 1
    %1686 = vsyncpa [#allocation14], 1
    %1687 = vsyncpa [#allocation17], 1
    %1688 = vsyncpa [#allocation6], 1
    %s1689 = scalar_lea.sflag [#allocation6], 1
    %1690 = vsyncpa %s1689, 1

</llo_original>
